<compile_context>
chip_gen: v7x
topology: tpu7x:2x2x1
jax: 0.10.0
libtpu: 0.0.40
codegen_flags: <defaults>
</compile_context>

<pallas_src>
import math
import functools

import jax
import jax.numpy as jnp
from jax import lax
from jax.experimental import pallas as pl
from jax.experimental.pallas import tpu as pltpu


# ----------------------------- fused MHA kernel (one batch per grid step) -----------------------------

def _mha_fused_kernel(xq_ref, xk_ref, xv_ref,
                      wq_ref, bq_ref, wk_ref, bk_ref, wv_ref, bv_ref,
                      wo_ref, bo_ref, o_ref,
                      *, heads, d_k, scale, num_keep):
    # Activation blocks are (1, S, D); weights are (D_in, D_out); biases (1, D_out).
    xq = xq_ref[0].astype(jnp.float32)      # (Sq, D)
    xk = xk_ref[0].astype(jnp.float32)      # (Sk, D)
    xv = xv_ref[0].astype(jnp.float32)      # (Sk, D)

    # q/k/v projections: plain x @ W (weights pre-transposed in the wrapper).
    q = jnp.dot(xq, wq_ref[...], preferred_element_type=jnp.float32) + bq_ref[...]
    k = jnp.dot(xk, wk_ref[...], preferred_element_type=jnp.float32) + bk_ref[...]
    v = jnp.dot(xv, wv_ref[...], preferred_element_type=jnp.float32) + bv_ref[...]

    Sq = q.shape[0]
    Sk = k.shape[0]
    D = q.shape[1]
    num_drop = Sk - num_keep

    lane_idx = lax.broadcasted_iota(jnp.int32, (1, Sk), 1)

    # Output projection is accumulated per head:
    #   concat @ Wo == sum_h out_h @ Wo[h*d_k:(h+1)*d_k, :]
    # which removes the head-concat entirely.
    acc = jnp.zeros((Sq, D), jnp.float32)

    for h in range(heads):
        sl = slice(h * d_k, (h + 1) * d_k)
        q_h = q[:, sl]                       # (Sq, d_k)
        k_h = k[:, sl]                       # (Sk, d_k)
        v_h = v[:, sl]                       # (Sk, d_k)

        # scores = q_h @ k_h^T / sqrt(d_k)   (MXU, transposed RHS)
        s = lax.dot_general(q_h, k_h, (((1,), (1,)), ((), ())),
                            preferred_element_type=jnp.float32) * scale
        # TODO(synk): optional padding mask (mask is None here) would be
        #             jnp.where(mask == 0, -1e9, s) before the softmax.

        # softmax over the key axis; normalize with a reciprocal multiply
        # (Sq divides per head instead of Sq*Sk divides).
        m = jnp.max(s, axis=-1, keepdims=True)
        e = jnp.exp(s - m)
        l = jnp.sum(e, axis=-1, keepdims=True)          # (Sq, 1)
        recip = 1.0 / l
        p = e * recip                                   # (Sq, Sk)

        # Column pruning: keep the `num_keep` key columns with the largest
        # column sum.  Iteratively drop the `num_drop` smallest column sums;
        # on ties drop the highest index (== torch.topk keeps lowest index).
        cs = jnp.sum(p, axis=0, keepdims=True)          # (1, Sk)
        active = jnp.ones((1, Sk), jnp.float32)
        for _ in range(num_drop):                       # static, ~Sk/10 iterations
            masked = jnp.where(active > 0.0, cs, jnp.inf)
            mn = jnp.min(masked, axis=1, keepdims=True)             # (1, 1)
            cand = jnp.where(masked == mn, lane_idx, -1)            # (1, Sk)
            drop = jnp.max(cand, axis=1, keepdims=True)             # (1, 1)
            active = jnp.where(lane_idx == drop, 0.0, active)

        pruned = p * active                             # zero dropped columns, no renorm
        # TODO(synk): nn.Dropout(0.1) is training-mode only in PyTorch; identity here.

        out_h = jnp.dot(pruned, v_h, preferred_element_type=jnp.float32)      # (Sq, d_k)
        acc = acc + jnp.dot(out_h, wo_ref[sl, :], preferred_element_type=jnp.float32)

    # Lane-dense store: one (Sq, d_model) tile per batch element.
    o_ref[0] = (acc + bo_ref[...]).astype(o_ref.dtype)


# ----------------------------- wrapper -----------------------------

def multi_head_attention(q_in, k_in, v_in, params, heads):
    bs, Sq, D = q_in.shape
    Sk = k_in.shape[1]
    d_k = D // heads
    # matches PyTorch: pruning_ratio = 1 - 0.1; int(num_columns * pruning_ratio)
    num_keep = int(Sk * (1.0 - 0.1))

    # Pre-transpose nn.Linear weights (out_features, in_features) -> (in, out) once.
    wqT, wkT = params["wq"].T, params["wk"].T
    wvT, woT = params["wv"].T, params["wo"].T
    bq = params["bq"].reshape(1, D)
    bk = params["bk"].reshape(1, D)
    bv = params["bv"].reshape(1, D)
    bo = params["bo"].reshape(1, D)

    kern = functools.partial(_mha_fused_kernel, heads=heads, d_k=d_k,
                             scale=1.0 / math.sqrt(d_k), num_keep=num_keep)

    def act_spec(S_):
        return pl.BlockSpec((1, S_, D), lambda b: (b, 0, 0))

    w_spec = pl.BlockSpec((D, D), lambda b: (0, 0))
    b_spec = pl.BlockSpec((1, D), lambda b: (0, 0))

    return pl.pallas_call(
        kern,
        out_shape=jax.ShapeDtypeStruct((bs, Sq, D), q_in.dtype),
        grid=(bs,),
        in_specs=[act_spec(Sq), act_spec(Sk), act_spec(Sk),
                  w_spec, b_spec, w_spec, b_spec, w_spec, b_spec,
                  w_spec, b_spec],
        out_specs=act_spec(Sq),
        compiler_params=pltpu.CompilerParams(dimension_semantics=("parallel",)),
    )(q_in, k_in, v_in, wqT, bq, wkT, bk, wvT, bv, woT, bo)


# ----------------------------- pure-JAX reference (checking) -----------------------------

def reference_forward(q_in, k_in, v_in, params, heads):
    bs, S, D = q_in.shape
    d_k = D // heads

    def lin(x, w, b):
        return jnp.einsum("bsd,od->bso", x, w) + b

    def split(x):
        return x.reshape(bs, S, heads, d_k).transpose(0, 2, 1, 3)

    q = split(lin(q_in, params["wq"], params["bq"]))
    k = split(lin(k_in, params["wk"], params["bk"]))
    v = split(lin(v_in, params["wv"], params["bv"]))

    scores = jnp.einsum("bhqd,bhkd->bhqk", q, k) / math.sqrt(d_k)
    p = jax.nn.softmax(scores, axis=-1)
    Sk = p.shape[-1]
    num_keep = int(Sk * (1.0 - 0.1))
    col_sum = jnp.sum(p, axis=2, keepdims=True)                       # (bs, h, 1, Sk)
    _, idx = lax.top_k(col_sum, num_keep)                             # (bs, h, 1, num_keep)
    keep = jnp.sum(jax.nn.one_hot(idx, Sk, dtype=p.dtype), axis=-2)   # (bs, h, 1, Sk)
    pruned = p * keep
    out = jnp.einsum("bhqk,bhkd->bhqd", pruned, v)
    concat = out.transpose(0, 2, 1, 3).reshape(bs, S, D)
    return lin(concat, params["wo"], params["bo"])


# ----------------------------- main -----------------------------

if __name__ == "__main__":
    heads = 4
    d_model = 32
    bs, seq = 2, 8

    key = jax.random.PRNGKey(0)
    ks = jax.random.split(key, 11)
    bound = 1.0 / math.sqrt(d_model)

    def u(k, shape):
        return jax.random.uniform(k, shape, jnp.float32, -bound, bound)

    params = {
        "wq": u(ks[0], (d_model, d_model)), "bq": u(ks[1], (d_model,)),
        "wk": u(ks[2], (d_model, d_model)), "bk": u(ks[3], (d_model,)),
        "wv": u(ks[4], (d_model, d_model)), "bv": u(ks[5], (d_model,)),
        "wo": u(ks[6], (d_model, d_model)), "bo": u(ks[7], (d_model,)),
    }

    q_in = jax.random.normal(ks[8], (bs, seq, d_model), jnp.float32)
    k_in = jax.random.normal(ks[9], (bs, seq, d_model), jnp.float32)
    v_in = jax.random.normal(ks[10], (bs, seq, d_model), jnp.float32)

    out = multi_head_attention(q_in, k_in, v_in, params, heads)
    out = jax.block_until_ready(out)

    ref = jax.block_until_ready(reference_forward(q_in, k_in, v_in, params, heads))
    assert out.shape == (bs, seq, d_model)
    assert jnp.allclose(out, ref, rtol=2e-3, atol=2e-3), "mismatch vs reference"

    print("KERNEL_OK")
</pallas_src>

<mosaic_0001>
module attributes {stable_mosaic.version = 11 : i64} {
  func.func @_mha_fused_kernel(%arg0: i32, %arg1: memref<1x8x32xf32, #tpu.memory_space<vmem>>, %arg2: memref<1x8x32xf32, #tpu.memory_space<vmem>>, %arg3: memref<1x8x32xf32, #tpu.memory_space<vmem>>, %arg4: memref<32x32xf32, #tpu.memory_space<vmem>>, %arg5: memref<1x32xf32, #tpu.memory_space<vmem>>, %arg6: memref<32x32xf32, #tpu.memory_space<vmem>>, %arg7: memref<1x32xf32, #tpu.memory_space<vmem>>, %arg8: memref<32x32xf32, #tpu.memory_space<vmem>>, %arg9: memref<1x32xf32, #tpu.memory_space<vmem>>, %arg10: memref<32x32xf32, #tpu.memory_space<vmem>>, %arg11: memref<1x32xf32, #tpu.memory_space<vmem>>, %arg12: memref<1x8x32xf32, #tpu.memory_space<vmem>>) attributes {dimension_semantics = [#tpu.dimension_semantics<parallel>], iteration_bounds = array<i64: 2>, scalar_prefetch = 0 : i64, scratch_operands = 0 : i64, tpu.core_type = #tpu.core_type<tc>, window_params = [{transform_indices = @transform_0, window_bounds = array<i64: 1, 8, 32>}, {transform_indices = @transform_1, window_bounds = array<i64: 1, 8, 32>}, {transform_indices = @transform_2, window_bounds = array<i64: 1, 8, 32>}, {pipeline_mode = #tpu.pipeline_mode<synchronous>, transform_indices = @transform_3, window_bounds = array<i64: 32, 32>}, {pipeline_mode = #tpu.pipeline_mode<synchronous>, transform_indices = @transform_4, window_bounds = array<i64: 1, 32>}, {pipeline_mode = #tpu.pipeline_mode<synchronous>, transform_indices = @transform_5, window_bounds = array<i64: 32, 32>}, {pipeline_mode = #tpu.pipeline_mode<synchronous>, transform_indices = @transform_6, window_bounds = array<i64: 1, 32>}, {pipeline_mode = #tpu.pipeline_mode<synchronous>, transform_indices = @transform_7, window_bounds = array<i64: 32, 32>}, {pipeline_mode = #tpu.pipeline_mode<synchronous>, transform_indices = @transform_8, window_bounds = array<i64: 1, 32>}, {pipeline_mode = #tpu.pipeline_mode<synchronous>, transform_indices = @transform_9, window_bounds = array<i64: 32, 32>}, {pipeline_mode = #tpu.pipeline_mode<synchronous>, transform_indices = @transform_10, window_bounds = array<i64: 1, 32>}, {transform_indices = @transform_11, window_bounds = array<i64: 1, 8, 32>}]} {
    %c0 = arith.constant 0 : index
    %c0_0 = arith.constant 0 : index
    %c0_1 = arith.constant 0 : index
    %0 = vector.load %arg1[%c0, %c0_0, %c0_1] : memref<1x8x32xf32, #tpu.memory_space<vmem>>, vector<1x8x32xf32>
    %1 = vector.shape_cast %0 : vector<1x8x32xf32> to vector<8x32xf32>
    %c0_2 = arith.constant 0 : index
    %c0_3 = arith.constant 0 : index
    %c0_4 = arith.constant 0 : index
    %2 = vector.load %arg2[%c0_2, %c0_3, %c0_4] : memref<1x8x32xf32, #tpu.memory_space<vmem>>, vector<1x8x32xf32>
    %3 = vector.shape_cast %2 : vector<1x8x32xf32> to vector<8x32xf32>
    %c0_5 = arith.constant 0 : index
    %c0_6 = arith.constant 0 : index
    %c0_7 = arith.constant 0 : index
    %4 = vector.load %arg3[%c0_5, %c0_6, %c0_7] : memref<1x8x32xf32, #tpu.memory_space<vmem>>, vector<1x8x32xf32>
    %5 = vector.shape_cast %4 : vector<1x8x32xf32> to vector<8x32xf32>
    %c0_8 = arith.constant 0 : index
    %c0_9 = arith.constant 0 : index
    %6 = vector.load %arg4[%c0_8, %c0_9] : memref<32x32xf32, #tpu.memory_space<vmem>>, vector<32x32xf32>
    %cst = arith.constant dense<0.000000e+00> : vector<8x32xf32>
    %7 = tpu.matmul %1, %6, %cst {dimension_numbers = #tpu.dot_dimension_numbers<[1], [0], [0], [1], [0, 0, 1, 1], [], []>} : vector<8x32xf32>, vector<32x32xf32>, vector<8x32xf32> -> vector<8x32xf32>
    %c0_10 = arith.constant 0 : index
    %c0_11 = arith.constant 0 : index
    %8 = vector.load %arg5[%c0_10, %c0_11] : memref<1x32xf32, #tpu.memory_space<vmem>>, vector<1x32xf32>
    %9 = vector.broadcast %8 : vector<1x32xf32> to vector<8x32xf32>
    %10 = arith.addf %7, %9 : vector<8x32xf32>
    %c0_12 = arith.constant 0 : index
    %c0_13 = arith.constant 0 : index
    %11 = vector.load %arg6[%c0_12, %c0_13] : memref<32x32xf32, #tpu.memory_space<vmem>>, vector<32x32xf32>
    %cst_14 = arith.constant dense<0.000000e+00> : vector<8x32xf32>
    %12 = tpu.matmul %3, %11, %cst_14 {dimension_numbers = #tpu.dot_dimension_numbers<[1], [0], [0], [1], [0, 0, 1, 1], [], []>} : vector<8x32xf32>, vector<32x32xf32>, vector<8x32xf32> -> vector<8x32xf32>
    %c0_15 = arith.constant 0 : index
    %c0_16 = arith.constant 0 : index
    %13 = vector.load %arg7[%c0_15, %c0_16] : memref<1x32xf32, #tpu.memory_space<vmem>>, vector<1x32xf32>
    %14 = vector.broadcast %13 : vector<1x32xf32> to vector<8x32xf32>
    %15 = arith.addf %12, %14 : vector<8x32xf32>
    %c0_17 = arith.constant 0 : index
    %c0_18 = arith.constant 0 : index
    %16 = vector.load %arg8[%c0_17, %c0_18] : memref<32x32xf32, #tpu.memory_space<vmem>>, vector<32x32xf32>
    %cst_19 = arith.constant dense<0.000000e+00> : vector<8x32xf32>
    %17 = tpu.matmul %5, %16, %cst_19 {dimension_numbers = #tpu.dot_dimension_numbers<[1], [0], [0], [1], [0, 0, 1, 1], [], []>} : vector<8x32xf32>, vector<32x32xf32>, vector<8x32xf32> -> vector<8x32xf32>
    %c0_20 = arith.constant 0 : index
    %c0_21 = arith.constant 0 : index
    %18 = vector.load %arg9[%c0_20, %c0_21] : memref<1x32xf32, #tpu.memory_space<vmem>>, vector<1x32xf32>
    %19 = vector.broadcast %18 : vector<1x32xf32> to vector<8x32xf32>
    %20 = arith.addf %17, %19 : vector<8x32xf32>
    %21 = tpu.iota {dimensions = array<i32: 1>} : vector<1x8xi32>
    %cst_22 = arith.constant 0.000000e+00 : f32
    %22 = vector.broadcast %cst_22 : f32 to vector<8x32xf32>
    %23 = vector.extract_strided_slice %10 {offsets = [0, 0], sizes = [8, 8], strides = [1, 1]} : vector<8x32xf32> to vector<8x8xf32>
    %24 = vector.extract_strided_slice %15 {offsets = [0, 0], sizes = [8, 8], strides = [1, 1]} : vector<8x32xf32> to vector<8x8xf32>
    %25 = vector.extract_strided_slice %20 {offsets = [0, 0], sizes = [8, 8], strides = [1, 1]} : vector<8x32xf32> to vector<8x8xf32>
    %cst_23 = arith.constant dense<0.000000e+00> : vector<8x8xf32>
    %26 = tpu.matmul %23, %24, %cst_23 {dimension_numbers = #tpu.dot_dimension_numbers<[1], [1], [0], [0], [0, 0, 1, 0], [], []>} : vector<8x8xf32>, vector<8x8xf32>, vector<8x8xf32> -> vector<8x8xf32>
    %cst_24 = arith.constant 0.353553385 : f32
    %27 = vector.broadcast %cst_24 : f32 to vector<8x8xf32>
    %28 = arith.mulf %26, %27 : vector<8x8xf32>
    %cst_25 = arith.constant dense<0xFF800000> : vector<8xf32>
    %29 = vector.multi_reduction <maximumf>, %28, %cst_25 [1] : vector<8x8xf32> to vector<8xf32>
    %30 = vector.shape_cast %29 : vector<8xf32> to vector<8x1xf32>
    %31 = vector.broadcast %30 : vector<8x1xf32> to vector<8x8xf32>
    %32 = arith.subf %28, %31 : vector<8x8xf32>
    %33 = math.exp %32 : vector<8x8xf32>
    %cst_26 = arith.constant dense<0.000000e+00> : vector<8xf32>
    %34 = vector.multi_reduction <add>, %33, %cst_26 [1] : vector<8x8xf32> to vector<8xf32>
    %35 = vector.shape_cast %34 : vector<8xf32> to vector<8x1xf32>
    %cst_27 = arith.constant 1.000000e+00 : f32
    %36 = vector.broadcast %cst_27 : f32 to vector<8x1xf32>
    %37 = arith.divf %36, %35 : vector<8x1xf32>
    %38 = vector.broadcast %37 : vector<8x1xf32> to vector<8x8xf32>
    %39 = arith.mulf %33, %38 : vector<8x8xf32>
    %cst_28 = arith.constant dense<0.000000e+00> : vector<8xf32>
    %40 = vector.multi_reduction <add>, %39, %cst_28 [0] : vector<8x8xf32> to vector<8xf32>
    %41 = vector.shape_cast %40 : vector<8xf32> to vector<1x8xf32>
    %cst_29 = arith.constant 1.000000e+00 : f32
    %42 = vector.broadcast %cst_29 : f32 to vector<1x8xf32>
    %cst_30 = arith.constant 0.000000e+00 : f32
    %43 = vector.broadcast %cst_30 : f32 to vector<1x8xf32>
    %44 = arith.cmpf ogt, %42, %43 : vector<1x8xf32>
    %cst_31 = arith.constant 0x7F800000 : f32
    %45 = vector.broadcast %cst_31 : f32 to vector<1x8xf32>
    %46 = arith.select %44, %41, %45 : vector<1x8xi1>, vector<1x8xf32>
    %cst_32 = arith.constant dense<0x7F800000> : vector<1xf32>
    %47 = vector.multi_reduction <minimumf>, %46, %cst_32 [1] : vector<1x8xf32> to vector<1xf32>
    %48 = vector.shape_cast %47 : vector<1xf32> to vector<1x1xf32>
    %49 = vector.broadcast %48 : vector<1x1xf32> to vector<1x8xf32>
    %50 = arith.cmpf oeq, %46, %49 : vector<1x8xf32>
    %c-1_i32 = arith.constant -1 : i32
    %51 = vector.broadcast %c-1_i32 : i32 to vector<1x8xi32>
    %52 = arith.select %50, %21, %51 : vector<1x8xi1>, vector<1x8xi32>
    %cst_33 = arith.constant dense<-2147483648> : vector<1xi32>
    %53 = vector.multi_reduction <maxsi>, %52, %cst_33 [1] : vector<1x8xi32> to vector<1xi32>
    %54 = vector.shape_cast %53 : vector<1xi32> to vector<1x1xi32>
    %55 = vector.broadcast %54 : vector<1x1xi32> to vector<1x8xi32>
    %56 = arith.cmpi eq, %21, %55 : vector<1x8xi32>
    %cst_34 = arith.constant 0.000000e+00 : f32
    %57 = vector.broadcast %cst_34 : f32 to vector<1x8xf32>
    %58 = arith.select %56, %57, %42 : vector<1x8xi1>, vector<1x8xf32>
    %59 = vector.broadcast %58 : vector<1x8xf32> to vector<8x8xf32>
    %60 = arith.mulf %39, %59 : vector<8x8xf32>
    %cst_35 = arith.constant dense<0.000000e+00> : vector<8x8xf32>
    %61 = tpu.matmul %60, %25, %cst_35 {dimension_numbers = #tpu.dot_dimension_numbers<[1], [0], [0], [1], [0, 0, 1, 1], [], []>} : vector<8x8xf32>, vector<8x8xf32>, vector<8x8xf32> -> vector<8x8xf32>
    %c0_36 = arith.constant 0 : index
    %c0_37 = arith.constant 0 : index
    %62 = vector.load %arg10[%c0_36, %c0_37] : memref<32x32xf32, #tpu.memory_space<vmem>>, vector<8x32xf32>
    %cst_38 = arith.constant dense<0.000000e+00> : vector<8x32xf32>
    %63 = tpu.matmul %61, %62, %cst_38 {dimension_numbers = #tpu.dot_dimension_numbers<[1], [0], [0], [1], [0, 0, 1, 1], [], []>} : vector<8x8xf32>, vector<8x32xf32>, vector<8x32xf32> -> vector<8x32xf32>
    %64 = arith.addf %22, %63 : vector<8x32xf32>
    %65 = vector.extract_strided_slice %10 {offsets = [0, 8], sizes = [8, 8], strides = [1, 1]} : vector<8x32xf32> to vector<8x8xf32>
    %66 = vector.extract_strided_slice %15 {offsets = [0, 8], sizes = [8, 8], strides = [1, 1]} : vector<8x32xf32> to vector<8x8xf32>
    %67 = vector.extract_strided_slice %20 {offsets = [0, 8], sizes = [8, 8], strides = [1, 1]} : vector<8x32xf32> to vector<8x8xf32>
    %cst_39 = arith.constant dense<0.000000e+00> : vector<8x8xf32>
    %68 = tpu.matmul %65, %66, %cst_39 {dimension_numbers = #tpu.dot_dimension_numbers<[1], [1], [0], [0], [0, 0, 1, 0], [], []>} : vector<8x8xf32>, vector<8x8xf32>, vector<8x8xf32> -> vector<8x8xf32>
    %cst_40 = arith.constant 0.353553385 : f32
    %69 = vector.broadcast %cst_40 : f32 to vector<8x8xf32>
    %70 = arith.mulf %68, %69 : vector<8x8xf32>
    %cst_41 = arith.constant dense<0xFF800000> : vector<8xf32>
    %71 = vector.multi_reduction <maximumf>, %70, %cst_41 [1] : vector<8x8xf32> to vector<8xf32>
    %72 = vector.shape_cast %71 : vector<8xf32> to vector<8x1xf32>
    %73 = vector.broadcast %72 : vector<8x1xf32> to vector<8x8xf32>
    %74 = arith.subf %70, %73 : vector<8x8xf32>
    %75 = math.exp %74 : vector<8x8xf32>
    %cst_42 = arith.constant dense<0.000000e+00> : vector<8xf32>
    %76 = vector.multi_reduction <add>, %75, %cst_42 [1] : vector<8x8xf32> to vector<8xf32>
    %77 = vector.shape_cast %76 : vector<8xf32> to vector<8x1xf32>
    %cst_43 = arith.constant 1.000000e+00 : f32
    %78 = vector.broadcast %cst_43 : f32 to vector<8x1xf32>
    %79 = arith.divf %78, %77 : vector<8x1xf32>
    %80 = vector.broadcast %79 : vector<8x1xf32> to vector<8x8xf32>
    %81 = arith.mulf %75, %80 : vector<8x8xf32>
    %cst_44 = arith.constant dense<0.000000e+00> : vector<8xf32>
    %82 = vector.multi_reduction <add>, %81, %cst_44 [0] : vector<8x8xf32> to vector<8xf32>
    %83 = vector.shape_cast %82 : vector<8xf32> to vector<1x8xf32>
    %cst_45 = arith.constant 1.000000e+00 : f32
    %84 = vector.broadcast %cst_45 : f32 to vector<1x8xf32>
    %cst_46 = arith.constant 0.000000e+00 : f32
    %85 = vector.broadcast %cst_46 : f32 to vector<1x8xf32>
    %86 = arith.cmpf ogt, %84, %85 : vector<1x8xf32>
    %cst_47 = arith.constant 0x7F800000 : f32
    %87 = vector.broadcast %cst_47 : f32 to vector<1x8xf32>
    %88 = arith.select %86, %83, %87 : vector<1x8xi1>, vector<1x8xf32>
    %cst_48 = arith.constant dense<0x7F800000> : vector<1xf32>
    %89 = vector.multi_reduction <minimumf>, %88, %cst_48 [1] : vector<1x8xf32> to vector<1xf32>
    %90 = vector.shape_cast %89 : vector<1xf32> to vector<1x1xf32>
    %91 = vector.broadcast %90 : vector<1x1xf32> to vector<1x8xf32>
    %92 = arith.cmpf oeq, %88, %91 : vector<1x8xf32>
    %c-1_i32_49 = arith.constant -1 : i32
    %93 = vector.broadcast %c-1_i32_49 : i32 to vector<1x8xi32>
    %94 = arith.select %92, %21, %93 : vector<1x8xi1>, vector<1x8xi32>
    %cst_50 = arith.constant dense<-2147483648> : vector<1xi32>
    %95 = vector.multi_reduction <maxsi>, %94, %cst_50 [1] : vector<1x8xi32> to vector<1xi32>
    %96 = vector.shape_cast %95 : vector<1xi32> to vector<1x1xi32>
    %97 = vector.broadcast %96 : vector<1x1xi32> to vector<1x8xi32>
    %98 = arith.cmpi eq, %21, %97 : vector<1x8xi32>
    %cst_51 = arith.constant 0.000000e+00 : f32
    %99 = vector.broadcast %cst_51 : f32 to vector<1x8xf32>
    %100 = arith.select %98, %99, %84 : vector<1x8xi1>, vector<1x8xf32>
    %101 = vector.broadcast %100 : vector<1x8xf32> to vector<8x8xf32>
    %102 = arith.mulf %81, %101 : vector<8x8xf32>
    %cst_52 = arith.constant dense<0.000000e+00> : vector<8x8xf32>
    %103 = tpu.matmul %102, %67, %cst_52 {dimension_numbers = #tpu.dot_dimension_numbers<[1], [0], [0], [1], [0, 0, 1, 1], [], []>} : vector<8x8xf32>, vector<8x8xf32>, vector<8x8xf32> -> vector<8x8xf32>
    %c8 = arith.constant 8 : index
    %c0_53 = arith.constant 0 : index
    %104 = vector.load %arg10[%c8, %c0_53] : memref<32x32xf32, #tpu.memory_space<vmem>>, vector<8x32xf32>
    %cst_54 = arith.constant dense<0.000000e+00> : vector<8x32xf32>
    %105 = tpu.matmul %103, %104, %cst_54 {dimension_numbers = #tpu.dot_dimension_numbers<[1], [0], [0], [1], [0, 0, 1, 1], [], []>} : vector<8x8xf32>, vector<8x32xf32>, vector<8x32xf32> -> vector<8x32xf32>
    %106 = arith.addf %64, %105 : vector<8x32xf32>
    %107 = vector.extract_strided_slice %10 {offsets = [0, 16], sizes = [8, 8], strides = [1, 1]} : vector<8x32xf32> to vector<8x8xf32>
    %108 = vector.extract_strided_slice %15 {offsets = [0, 16], sizes = [8, 8], strides = [1, 1]} : vector<8x32xf32> to vector<8x8xf32>
    %109 = vector.extract_strided_slice %20 {offsets = [0, 16], sizes = [8, 8], strides = [1, 1]} : vector<8x32xf32> to vector<8x8xf32>
    %cst_55 = arith.constant dense<0.000000e+00> : vector<8x8xf32>
    %110 = tpu.matmul %107, %108, %cst_55 {dimension_numbers = #tpu.dot_dimension_numbers<[1], [1], [0], [0], [0, 0, 1, 0], [], []>} : vector<8x8xf32>, vector<8x8xf32>, vector<8x8xf32> -> vector<8x8xf32>
    %cst_56 = arith.constant 0.353553385 : f32
    %111 = vector.broadcast %cst_56 : f32 to vector<8x8xf32>
    %112 = arith.mulf %110, %111 : vector<8x8xf32>
    %cst_57 = arith.constant dense<0xFF800000> : vector<8xf32>
    %113 = vector.multi_reduction <maximumf>, %112, %cst_57 [1] : vector<8x8xf32> to vector<8xf32>
    %114 = vector.shape_cast %113 : vector<8xf32> to vector<8x1xf32>
    %115 = vector.broadcast %114 : vector<8x1xf32> to vector<8x8xf32>
    %116 = arith.subf %112, %115 : vector<8x8xf32>
    %117 = math.exp %116 : vector<8x8xf32>
    %cst_58 = arith.constant dense<0.000000e+00> : vector<8xf32>
    %118 = vector.multi_reduction <add>, %117, %cst_58 [1] : vector<8x8xf32> to vector<8xf32>
    %119 = vector.shape_cast %118 : vector<8xf32> to vector<8x1xf32>
    %cst_59 = arith.constant 1.000000e+00 : f32
    %120 = vector.broadcast %cst_59 : f32 to vector<8x1xf32>
    %121 = arith.divf %120, %119 : vector<8x1xf32>
    %122 = vector.broadcast %121 : vector<8x1xf32> to vector<8x8xf32>
    %123 = arith.mulf %117, %122 : vector<8x8xf32>
    %cst_60 = arith.constant dense<0.000000e+00> : vector<8xf32>
    %124 = vector.multi_reduction <add>, %123, %cst_60 [0] : vector<8x8xf32> to vector<8xf32>
    %125 = vector.shape_cast %124 : vector<8xf32> to vector<1x8xf32>
    %cst_61 = arith.constant 1.000000e+00 : f32
    %126 = vector.broadcast %cst_61 : f32 to vector<1x8xf32>
    %cst_62 = arith.constant 0.000000e+00 : f32
    %127 = vector.broadcast %cst_62 : f32 to vector<1x8xf32>
    %128 = arith.cmpf ogt, %126, %127 : vector<1x8xf32>
    %cst_63 = arith.constant 0x7F800000 : f32
    %129 = vector.broadcast %cst_63 : f32 to vector<1x8xf32>
    %130 = arith.select %128, %125, %129 : vector<1x8xi1>, vector<1x8xf32>
    %cst_64 = arith.constant dense<0x7F800000> : vector<1xf32>
    %131 = vector.multi_reduction <minimumf>, %130, %cst_64 [1] : vector<1x8xf32> to vector<1xf32>
    %132 = vector.shape_cast %131 : vector<1xf32> to vector<1x1xf32>
    %133 = vector.broadcast %132 : vector<1x1xf32> to vector<1x8xf32>
    %134 = arith.cmpf oeq, %130, %133 : vector<1x8xf32>
    %c-1_i32_65 = arith.constant -1 : i32
    %135 = vector.broadcast %c-1_i32_65 : i32 to vector<1x8xi32>
    %136 = arith.select %134, %21, %135 : vector<1x8xi1>, vector<1x8xi32>
    %cst_66 = arith.constant dense<-2147483648> : vector<1xi32>
    %137 = vector.multi_reduction <maxsi>, %136, %cst_66 [1] : vector<1x8xi32> to vector<1xi32>
    %138 = vector.shape_cast %137 : vector<1xi32> to vector<1x1xi32>
    %139 = vector.broadcast %138 : vector<1x1xi32> to vector<1x8xi32>
    %140 = arith.cmpi eq, %21, %139 : vector<1x8xi32>
    %cst_67 = arith.constant 0.000000e+00 : f32
    %141 = vector.broadcast %cst_67 : f32 to vector<1x8xf32>
    %142 = arith.select %140, %141, %126 : vector<1x8xi1>, vector<1x8xf32>
    %143 = vector.broadcast %142 : vector<1x8xf32> to vector<8x8xf32>
    %144 = arith.mulf %123, %143 : vector<8x8xf32>
    %cst_68 = arith.constant dense<0.000000e+00> : vector<8x8xf32>
    %145 = tpu.matmul %144, %109, %cst_68 {dimension_numbers = #tpu.dot_dimension_numbers<[1], [0], [0], [1], [0, 0, 1, 1], [], []>} : vector<8x8xf32>, vector<8x8xf32>, vector<8x8xf32> -> vector<8x8xf32>
    %c16 = arith.constant 16 : index
    %c0_69 = arith.constant 0 : index
    %146 = vector.load %arg10[%c16, %c0_69] : memref<32x32xf32, #tpu.memory_space<vmem>>, vector<8x32xf32>
    %cst_70 = arith.constant dense<0.000000e+00> : vector<8x32xf32>
    %147 = tpu.matmul %145, %146, %cst_70 {dimension_numbers = #tpu.dot_dimension_numbers<[1], [0], [0], [1], [0, 0, 1, 1], [], []>} : vector<8x8xf32>, vector<8x32xf32>, vector<8x32xf32> -> vector<8x32xf32>
    %148 = arith.addf %106, %147 : vector<8x32xf32>
    %149 = vector.extract_strided_slice %10 {offsets = [0, 24], sizes = [8, 8], strides = [1, 1]} : vector<8x32xf32> to vector<8x8xf32>
    %150 = vector.extract_strided_slice %15 {offsets = [0, 24], sizes = [8, 8], strides = [1, 1]} : vector<8x32xf32> to vector<8x8xf32>
    %151 = vector.extract_strided_slice %20 {offsets = [0, 24], sizes = [8, 8], strides = [1, 1]} : vector<8x32xf32> to vector<8x8xf32>
    %cst_71 = arith.constant dense<0.000000e+00> : vector<8x8xf32>
    %152 = tpu.matmul %149, %150, %cst_71 {dimension_numbers = #tpu.dot_dimension_numbers<[1], [1], [0], [0], [0, 0, 1, 0], [], []>} : vector<8x8xf32>, vector<8x8xf32>, vector<8x8xf32> -> vector<8x8xf32>
    %cst_72 = arith.constant 0.353553385 : f32
    %153 = vector.broadcast %cst_72 : f32 to vector<8x8xf32>
    %154 = arith.mulf %152, %153 : vector<8x8xf32>
    %cst_73 = arith.constant dense<0xFF800000> : vector<8xf32>
    %155 = vector.multi_reduction <maximumf>, %154, %cst_73 [1] : vector<8x8xf32> to vector<8xf32>
    %156 = vector.shape_cast %155 : vector<8xf32> to vector<8x1xf32>
    %157 = vector.broadcast %156 : vector<8x1xf32> to vector<8x8xf32>
    %158 = arith.subf %154, %157 : vector<8x8xf32>
    %159 = math.exp %158 : vector<8x8xf32>
    %cst_74 = arith.constant dense<0.000000e+00> : vector<8xf32>
    %160 = vector.multi_reduction <add>, %159, %cst_74 [1] : vector<8x8xf32> to vector<8xf32>
    %161 = vector.shape_cast %160 : vector<8xf32> to vector<8x1xf32>
    %cst_75 = arith.constant 1.000000e+00 : f32
    %162 = vector.broadcast %cst_75 : f32 to vector<8x1xf32>
    %163 = arith.divf %162, %161 : vector<8x1xf32>
    %164 = vector.broadcast %163 : vector<8x1xf32> to vector<8x8xf32>
    %165 = arith.mulf %159, %164 : vector<8x8xf32>
    %cst_76 = arith.constant dense<0.000000e+00> : vector<8xf32>
    %166 = vector.multi_reduction <add>, %165, %cst_76 [0] : vector<8x8xf32> to vector<8xf32>
    %167 = vector.shape_cast %166 : vector<8xf32> to vector<1x8xf32>
    %cst_77 = arith.constant 1.000000e+00 : f32
    %168 = vector.broadcast %cst_77 : f32 to vector<1x8xf32>
    %cst_78 = arith.constant 0.000000e+00 : f32
    %169 = vector.broadcast %cst_78 : f32 to vector<1x8xf32>
    %170 = arith.cmpf ogt, %168, %169 : vector<1x8xf32>
    %cst_79 = arith.constant 0x7F800000 : f32
    %171 = vector.broadcast %cst_79 : f32 to vector<1x8xf32>
    %172 = arith.select %170, %167, %171 : vector<1x8xi1>, vector<1x8xf32>
    %cst_80 = arith.constant dense<0x7F800000> : vector<1xf32>
    %173 = vector.multi_reduction <minimumf>, %172, %cst_80 [1] : vector<1x8xf32> to vector<1xf32>
    %174 = vector.shape_cast %173 : vector<1xf32> to vector<1x1xf32>
    %175 = vector.broadcast %174 : vector<1x1xf32> to vector<1x8xf32>
    %176 = arith.cmpf oeq, %172, %175 : vector<1x8xf32>
    %c-1_i32_81 = arith.constant -1 : i32
    %177 = vector.broadcast %c-1_i32_81 : i32 to vector<1x8xi32>
    %178 = arith.select %176, %21, %177 : vector<1x8xi1>, vector<1x8xi32>
    %cst_82 = arith.constant dense<-2147483648> : vector<1xi32>
    %179 = vector.multi_reduction <maxsi>, %178, %cst_82 [1] : vector<1x8xi32> to vector<1xi32>
    %180 = vector.shape_cast %179 : vector<1xi32> to vector<1x1xi32>
    %181 = vector.broadcast %180 : vector<1x1xi32> to vector<1x8xi32>
    %182 = arith.cmpi eq, %21, %181 : vector<1x8xi32>
    %cst_83 = arith.constant 0.000000e+00 : f32
    %183 = vector.broadcast %cst_83 : f32 to vector<1x8xf32>
    %184 = arith.select %182, %183, %168 : vector<1x8xi1>, vector<1x8xf32>
    %185 = vector.broadcast %184 : vector<1x8xf32> to vector<8x8xf32>
    %186 = arith.mulf %165, %185 : vector<8x8xf32>
    %cst_84 = arith.constant dense<0.000000e+00> : vector<8x8xf32>
    %187 = tpu.matmul %186, %151, %cst_84 {dimension_numbers = #tpu.dot_dimension_numbers<[1], [0], [0], [1], [0, 0, 1, 1], [], []>} : vector<8x8xf32>, vector<8x8xf32>, vector<8x8xf32> -> vector<8x8xf32>
    %c24 = arith.constant 24 : index
    %c0_85 = arith.constant 0 : index
    %188 = vector.load %arg10[%c24, %c0_85] : memref<32x32xf32, #tpu.memory_space<vmem>>, vector<8x32xf32>
    %cst_86 = arith.constant dense<0.000000e+00> : vector<8x32xf32>
    %189 = tpu.matmul %187, %188, %cst_86 {dimension_numbers = #tpu.dot_dimension_numbers<[1], [0], [0], [1], [0, 0, 1, 1], [], []>} : vector<8x8xf32>, vector<8x32xf32>, vector<8x32xf32> -> vector<8x32xf32>
    %190 = arith.addf %148, %189 : vector<8x32xf32>
    %c0_87 = arith.constant 0 : index
    %c0_88 = arith.constant 0 : index
    %191 = vector.load %arg11[%c0_87, %c0_88] : memref<1x32xf32, #tpu.memory_space<vmem>>, vector<1x32xf32>
    %192 = vector.broadcast %191 : vector<1x32xf32> to vector<8x32xf32>
    %193 = arith.addf %190, %192 : vector<8x32xf32>
    %c0_89 = arith.constant 0 : index
    %c0_90 = arith.constant 0 : index
    %c0_91 = arith.constant 0 : index
    %194 = vector.load %arg12[%c0_89, %c0_90, %c0_91] : memref<1x8x32xf32, #tpu.memory_space<vmem>>, vector<1x8x32xf32>
    %195 = vector.shape_cast %194 : vector<1x8x32xf32> to vector<8x32xf32>
    %196 = vector.shape_cast %193 : vector<8x32xf32> to vector<1x8x32xf32>
    tpu.vector_store %arg12[%c0_89, %c0_90, %c0_91], %196 {strides = array<i32>} : memref<1x8x32xf32, #tpu.memory_space<vmem>>, vector<1x8x32xf32>,
    return
  }
  func.func @transform_0(%arg0: i32) -> (i32, i32, i32) {
    %c0_i32 = arith.constant 0 : i32
    %c0_i32_0 = arith.constant 0 : i32
    %c0_i32_1 = arith.constant 0 : i32
    return %arg0, %c0_i32, %c0_i32_0 : i32, i32, i32
  }
  func.func @transform_1(%arg0: i32) -> (i32, i32, i32) {
    %c0_i32 = arith.constant 0 : i32
    %c0_i32_0 = arith.constant 0 : i32
    %c0_i32_1 = arith.constant 0 : i32
    return %arg0, %c0_i32, %c0_i32_0 : i32, i32, i32
  }
  func.func @transform_2(%arg0: i32) -> (i32, i32, i32) {
    %c0_i32 = arith.constant 0 : i32
    %c0_i32_0 = arith.constant 0 : i32
    %c0_i32_1 = arith.constant 0 : i32
    return %arg0, %c0_i32, %c0_i32_0 : i32, i32, i32
  }
  func.func @transform_3(%arg0: i32) -> (i32, i32) {
    %c0_i32 = arith.constant 0 : i32
    %c0_i32_0 = arith.constant 0 : i32
    %c0_i32_1 = arith.constant 0 : i32
    return %c0_i32, %c0_i32_0 : i32, i32
  }
  func.func @transform_4(%arg0: i32) -> (i32, i32) {
    %c0_i32 = arith.constant 0 : i32
    %c0_i32_0 = arith.constant 0 : i32
    %c0_i32_1 = arith.constant 0 : i32
    return %c0_i32, %c0_i32_0 : i32, i32
  }
  func.func @transform_5(%arg0: i32) -> (i32, i32) {
    %c0_i32 = arith.constant 0 : i32
    %c0_i32_0 = arith.constant 0 : i32
    %c0_i32_1 = arith.constant 0 : i32
    return %c0_i32, %c0_i32_0 : i32, i32
  }
  func.func @transform_6(%arg0: i32) -> (i32, i32) {
    %c0_i32 = arith.constant 0 : i32
    %c0_i32_0 = arith.constant 0 : i32
    %c0_i32_1 = arith.constant 0 : i32
    return %c0_i32, %c0_i32_0 : i32, i32
  }
  func.func @transform_7(%arg0: i32) -> (i32, i32) {
    %c0_i32 = arith.constant 0 : i32
    %c0_i32_0 = arith.constant 0 : i32
    %c0_i32_1 = arith.constant 0 : i32
    return %c0_i32, %c0_i32_0 : i32, i32
  }
  func.func @transform_8(%arg0: i32) -> (i32, i32) {
    %c0_i32 = arith.constant 0 : i32
    %c0_i32_0 = arith.constant 0 : i32
    %c0_i32_1 = arith.constant 0 : i32
    return %c0_i32, %c0_i32_0 : i32, i32
  }
  func.func @transform_9(%arg0: i32) -> (i32, i32) {
    %c0_i32 = arith.constant 0 : i32
    %c0_i32_0 = arith.constant 0 : i32
    %c0_i32_1 = arith.constant 0 : i32
    return %c0_i32, %c0_i32_0 : i32, i32
  }
  func.func @transform_10(%arg0: i32) -> (i32, i32) {
    %c0_i32 = arith.constant 0 : i32
    %c0_i32_0 = arith.constant 0 : i32
    %c0_i32_1 = arith.constant 0 : i32
    return %c0_i32, %c0_i32_0 : i32, i32
  }
  func.func @transform_11(%arg0: i32) -> (i32, i32, i32) {
    %c0_i32 = arith.constant 0 : i32
    %c0_i32_0 = arith.constant 0 : i32
    %c0_i32_1 = arith.constant 0 : i32
    return %arg0, %c0_i32, %c0_i32_0 : i32, i32, i32
  }
}

</mosaic_0001>

<llo_original>
// kernel: tpu_custom_call.1
$region0: #{tpu_custom_call.1}
  #allocation0 [shape = 'u32[]', space=smem, size = 0x4, offset = 0x4, fixed_abs, tag = 'smem constant byte address 0x4 - core index']
  #allocation1 [shape = 'u32[144,128]{1,0:T(1,128)}', space=vmem, size = 0x12000, scoped, tag = 'internal scratch']
  %s0 = inlined_call_operand.hbm [shape: f32[2,8,32], index: 0, kind: input, shape index: {}]
  %s1 = inlined_call_operand.hbm [shape: f32[2,8,32], index: 1, kind: input, shape index: {}]
  %s2 = inlined_call_operand.hbm [shape: f32[2,8,32], index: 2, kind: input, shape index: {}]
  %s3 = inlined_call_operand.hbm [shape: f32[32,32], index: 3, kind: input, shape index: {}]
  %s4 = inlined_call_operand.vmem [shape: f32[1,32], index: 4, kind: input, shape index: {}]
  %s5 = inlined_call_operand.hbm [shape: f32[32,32], index: 5, kind: input, shape index: {}]
  %s6 = inlined_call_operand.vmem [shape: f32[1,32], index: 6, kind: input, shape index: {}]
  %s7 = inlined_call_operand.hbm [shape: f32[32,32], index: 7, kind: input, shape index: {}]
  %s8 = inlined_call_operand.hbm [shape: f32[1,32], index: 8, kind: input, shape index: {}]
  %s9 = inlined_call_operand.vmem [shape: f32[32,32], index: 9, kind: input, shape index: {}]
  %s10 = inlined_call_operand.vmem [shape: f32[1,32], index: 10, kind: input, shape index: {}]
  %s11 = inlined_call_operand.hbm [shape: f32[2,8,32], index: 11, kind: output, shape index: {}]
  %s12 = sld [smem:[#allocation0]]
  $region105: #{tpu_custom_call.1} parent=0
    _
  %s14 = ssub.s32 1, %s12
  %s15 = scalar_select 0, %s14, %s12
  $region1: #{tpu_custom_call.1} parent=0
    #allocation2 [shape = 'u8[8192]{0}', space=vmem, size = 0x2000, scoped, tag = 'input window, operand 0']
    #allocation3 [shape = 's32[2]{0}', space=sflag, size = 0x8, scoped, tag = 'scoped memory for tpu_custom_call.1']
    #allocation4 [shape = 's32[2]{0}', space=sflag, size = 0x8, scoped, tag = 'scoped memory for tpu_custom_call.1']
    #allocation5 [shape = 'u8[8192]{0}', space=vmem, size = 0x2000, scoped, tag = 'input window, operand 1']
    #allocation6 [shape = 's32[2]{0}', space=sflag, size = 0x8, scoped, tag = 'scoped memory for tpu_custom_call.1']
    #allocation7 [shape = 'u8[8192]{0}', space=vmem, size = 0x2000, scoped, tag = 'input window, operand 2']
    #allocation8 [shape = 'u8[16384]{0}', space=vmem, size = 0x4000, scoped, tag = 'input window, operand 3, single buffered']
    #allocation9 [shape = 's32[1]{0}', space=sflag, size = 0x4, scoped, tag = 'scoped memory for tpu_custom_call.1']
    #allocation10 [shape = 'u8[16384]{0}', space=vmem, size = 0x4000, scoped, tag = 'input window, operand 5, single buffered']
    #allocation11 [shape = 'u8[16384]{0}', space=vmem, size = 0x4000, scoped, tag = 'input window, operand 7, single buffered']
    #allocation12 [shape = 's32[1]{0}', space=sflag, size = 0x4, scoped, tag = 'scoped memory for tpu_custom_call.1']
    #allocation13 [shape = 'u8[512]{0}', space=vmem, size = 0x400, scoped, tag = 'input window, operand 8, single buffered']
    #allocation14 [shape = 'u8[8192]{0}', space=vmem, size = 0x2000, scoped, tag = 'output window, operand 0']
    %16 = vsyncpa [#allocation3], 0
    %s17 = scalar_lea.sflag [#allocation3], 1
    %18 = vsyncpa %s17, 0
    %19 = vsyncpa [#allocation6], 0
    %s20 = scalar_lea.sflag [#allocation6], 1
    %21 = vsyncpa %s20, 0
    %22 = vsyncpa [#allocation9], 0
    %23 = vsyncpa [#allocation12], 0
    %24 = vsyncpa [#allocation4], 0
    %s25 = scalar_lea.sflag [#allocation4], 1
    %26 = vsyncpa %s25, 0
    loop: start=0, step=1, limit=4
    $region2: #{tpu_custom_call.1} parent=1 // loop_pre_header
      _
    $region3: #{tpu_custom_call.1} parent=1 // loop_header
      %s28 = sphi 0, %s32
      %p29 = scmp.ge.s32.totalorder %s28, 4
      %s38 = sphi 0, %s40
      %s41 = sphi 0, %s38
      %s42 = sphi 0, %s41
      %s58 = sphi 0, %s42
      %s64 = sphi 0, %s66
      %s67 = sphi 0, %s64
      %s68 = sphi 0, %s67
      %s84 = sphi 0, %s68
      %s90 = sphi 0, %s92
      %s93 = sphi 0, %s90
      %s94 = sphi 0, %s93
      %s110 = sphi 0, %s94
      %s114 = sphi 0, %s114
      %s116 = sphi 0, %s114
      %s117 = sphi 0, %s116
      %s131 = sphi 0, %s117
      %s135 = sphi 0, %s135
      %s137 = sphi 0, %s135
      %s138 = sphi 0, %s137
      %s152 = sphi 0, %s138
      %s156 = sphi 0, %s156
      %s158 = sphi 0, %s156
      %s159 = sphi 0, %s158
      %s173 = sphi 0, %s159
      %s177 = sphi 0, %s177
      %s179 = sphi 0, %s177
      %s180 = sphi 0, %s179
      %s194 = sphi 0, %s180
      %s198 = sphi 0, %s198
      %s200 = sphi 0, %s198
      %s201 = sphi 0, %s200
      %s215 = sphi 0, %s201
      %s219 = sphi 0, %s219
      %s221 = sphi 0, %s219
      %s222 = sphi 0, %s221
      %s236 = sphi 0, %s222
      %s240 = sphi 0, %s240
      %s242 = sphi 0, %s240
      %s243 = sphi 0, %s242
      %s257 = sphi 0, %s243
      %s261 = sphi 0, %s261
      %s263 = sphi 0, %s261
      %s264 = sphi 0, %s263
      %s278 = sphi 0, %s264
      %s284 = sphi 0, %s286
      %s287 = sphi 0, %s284
      %s288 = sphi 0, %s287
      %s304 = sphi 0, %s288
    $region4: #{tpu_custom_call.1} parent=1 // loop_header_branch
      %31 = sbr.rel (%p29) target = $region8
    $region5: #{tpu_custom_call.1} parent=1 // loop_body
      %s33 = ssub.s32 %s28, 1
      %s34 = ssub.s32 %s28, 2
      %s35 = sadd.s32 %s28, 1
      %s36 = ssub.s32 %s28, %s35
      %p37 = scmp.eq.s32.totalorder %s36, 0
      %s39 = sadd.s32 %s38, 1
      %s40 = scalar_select %p37, %s38, %s39
      %p43 = pneg %p37
      %p44 = scmp.eq.s32.totalorder %s28, 1
      %p45 = por %p43, %p44
      %p46 = scmp.ne.s32.totalorder %s38, %s41
      %p47 = scmp.eq.s32.totalorder %s28, 0
      %p48 = por %p46, %p47
      %p49 = scmp.ne.s32.totalorder %s38, %s41
      %p50 = scmp.eq.s32.totalorder %s33, 1
      %p51 = por %p49, %p50
      %p52 = scmp.ne.s32.totalorder %s41, %s42
      %p53 = scmp.eq.s32.totalorder %s33, 0
      %p54 = por %p52, %p53
      %p55 = scmp.ne.s32.totalorder %s41, %s42
      %p56 = scmp.eq.s32.totalorder %s34, 1
      %p57 = por %p55, %p56
      %p59 = scmp.ne.s32.totalorder %s42, %s58
      %p60 = scmp.eq.s32.totalorder %s34, 0
      %p61 = por %p59, %p60
      %s62 = ssub.s32 %s28, %s35
      %p63 = scmp.eq.s32.totalorder %s62, 0
      %s65 = sadd.s32 %s64, 1
      %s66 = scalar_select %p63, %s64, %s65
      %p69 = pneg %p63
      %p70 = scmp.eq.s32.totalorder %s28, 1
      %p71 = por %p69, %p70
      %p72 = scmp.ne.s32.totalorder %s64, %s67
      %p73 = scmp.eq.s32.totalorder %s28, 0
      %p74 = por %p72, %p73
      %p75 = scmp.ne.s32.totalorder %s64, %s67
      %p76 = scmp.eq.s32.totalorder %s33, 1
      %p77 = por %p75, %p76
      %p78 = scmp.ne.s32.totalorder %s67, %s68
      %p79 = scmp.eq.s32.totalorder %s33, 0
      %p80 = por %p78, %p79
      %p81 = scmp.ne.s32.totalorder %s67, %s68
      %p82 = scmp.eq.s32.totalorder %s34, 1
      %p83 = por %p81, %p82
      %p85 = scmp.ne.s32.totalorder %s68, %s84
      %p86 = scmp.eq.s32.totalorder %s34, 0
      %p87 = por %p85, %p86
      %s88 = ssub.s32 %s28, %s35
      %p89 = scmp.eq.s32.totalorder %s88, 0
      %s91 = sadd.s32 %s90, 1
      %s92 = scalar_select %p89, %s90, %s91
      %p95 = pneg %p89
      %p96 = scmp.eq.s32.totalorder %s28, 1
      %p97 = por %p95, %p96
      %p98 = scmp.ne.s32.totalorder %s90, %s93
      %p99 = scmp.eq.s32.totalorder %s28, 0
      %p100 = por %p98, %p99
      %p101 = scmp.ne.s32.totalorder %s90, %s93
      %p102 = scmp.eq.s32.totalorder %s33, 1
      %p103 = por %p101, %p102
      %p104 = scmp.ne.s32.totalorder %s93, %s94
      %p105 = scmp.eq.s32.totalorder %s33, 0
      %p106 = por %p104, %p105
      %p107 = scmp.ne.s32.totalorder %s93, %s94
      %p108 = scmp.eq.s32.totalorder %s34, 1
      %p109 = por %p107, %p108
      %p111 = scmp.ne.s32.totalorder %s94, %s110
      %p112 = scmp.eq.s32.totalorder %s34, 0
      %p113 = por %p111, %p112
      %s115 = sadd.s32 %s114, 1
      %p118 = scmp.eq.s32.totalorder %s28, 1
      %p119 = scmp.ne.s32.totalorder %s114, %s116
      %p120 = scmp.eq.s32.totalorder %s28, 0
      %p121 = por %p119, %p120
      %p122 = scmp.ne.s32.totalorder %s114, %s116
      %p123 = scmp.eq.s32.totalorder %s33, 1
      %p124 = por %p122, %p123
      %p125 = scmp.ne.s32.totalorder %s116, %s117
      %p126 = scmp.eq.s32.totalorder %s33, 0
      %p127 = por %p125, %p126
      %p128 = scmp.ne.s32.totalorder %s116, %s117
      %p129 = scmp.eq.s32.totalorder %s34, 1
      %p130 = por %p128, %p129
      %p132 = scmp.ne.s32.totalorder %s117, %s131
      %p133 = scmp.eq.s32.totalorder %s34, 0
      %p134 = por %p132, %p133
      %s136 = sadd.s32 %s135, 1
      %p139 = scmp.eq.s32.totalorder %s28, 1
      %p140 = scmp.ne.s32.totalorder %s135, %s137
      %p141 = scmp.eq.s32.totalorder %s28, 0
      %p142 = por %p140, %p141
      %p143 = scmp.ne.s32.totalorder %s135, %s137
      %p144 = scmp.eq.s32.totalorder %s33, 1
      %p145 = por %p143, %p144
      %p146 = scmp.ne.s32.totalorder %s137, %s138
      %p147 = scmp.eq.s32.totalorder %s33, 0
      %p148 = por %p146, %p147
      %p149 = scmp.ne.s32.totalorder %s137, %s138
      %p150 = scmp.eq.s32.totalorder %s34, 1
      %p151 = por %p149, %p150
      %p153 = scmp.ne.s32.totalorder %s138, %s152
      %p154 = scmp.eq.s32.totalorder %s34, 0
      %p155 = por %p153, %p154
      %s157 = sadd.s32 %s156, 1
      %p160 = scmp.eq.s32.totalorder %s28, 1
      %p161 = scmp.ne.s32.totalorder %s156, %s158
      %p162 = scmp.eq.s32.totalorder %s28, 0
      %p163 = por %p161, %p162
      %p164 = scmp.ne.s32.totalorder %s156, %s158
      %p165 = scmp.eq.s32.totalorder %s33, 1
      %p166 = por %p164, %p165
      %p167 = scmp.ne.s32.totalorder %s158, %s159
      %p168 = scmp.eq.s32.totalorder %s33, 0
      %p169 = por %p167, %p168
      %p170 = scmp.ne.s32.totalorder %s158, %s159
      %p171 = scmp.eq.s32.totalorder %s34, 1
      %p172 = por %p170, %p171
      %p174 = scmp.ne.s32.totalorder %s159, %s173
      %p175 = scmp.eq.s32.totalorder %s34, 0
      %p176 = por %p174, %p175
      %s178 = sadd.s32 %s177, 1
      %p181 = scmp.eq.s32.totalorder %s28, 1
      %p182 = scmp.ne.s32.totalorder %s177, %s179
      %p183 = scmp.eq.s32.totalorder %s28, 0
      %p184 = por %p182, %p183
      %p185 = scmp.ne.s32.totalorder %s177, %s179
      %p186 = scmp.eq.s32.totalorder %s33, 1
      %p187 = por %p185, %p186
      %p188 = scmp.ne.s32.totalorder %s179, %s180
      %p189 = scmp.eq.s32.totalorder %s33, 0
      %p190 = por %p188, %p189
      %p191 = scmp.ne.s32.totalorder %s179, %s180
      %p192 = scmp.eq.s32.totalorder %s34, 1
      %p193 = por %p191, %p192
      %p195 = scmp.ne.s32.totalorder %s180, %s194
      %p196 = scmp.eq.s32.totalorder %s34, 0
      %p197 = por %p195, %p196
      %s199 = sadd.s32 %s198, 1
      %p202 = scmp.eq.s32.totalorder %s28, 1
      %p203 = scmp.ne.s32.totalorder %s198, %s200
      %p204 = scmp.eq.s32.totalorder %s28, 0
      %p205 = por %p203, %p204
      %p206 = scmp.ne.s32.totalorder %s198, %s200
      %p207 = scmp.eq.s32.totalorder %s33, 1
      %p208 = por %p206, %p207
      %p209 = scmp.ne.s32.totalorder %s200, %s201
      %p210 = scmp.eq.s32.totalorder %s33, 0
      %p211 = por %p209, %p210
      %p212 = scmp.ne.s32.totalorder %s200, %s201
      %p213 = scmp.eq.s32.totalorder %s34, 1
      %p214 = por %p212, %p213
      %p216 = scmp.ne.s32.totalorder %s201, %s215
      %p217 = scmp.eq.s32.totalorder %s34, 0
      %p218 = por %p216, %p217
      %s220 = sadd.s32 %s219, 1
      %p223 = scmp.eq.s32.totalorder %s28, 1
      %p224 = scmp.ne.s32.totalorder %s219, %s221
      %p225 = scmp.eq.s32.totalorder %s28, 0
      %p226 = por %p224, %p225
      %p227 = scmp.ne.s32.totalorder %s219, %s221
      %p228 = scmp.eq.s32.totalorder %s33, 1
      %p229 = por %p227, %p228
      %p230 = scmp.ne.s32.totalorder %s221, %s222
      %p231 = scmp.eq.s32.totalorder %s33, 0
      %p232 = por %p230, %p231
      %p233 = scmp.ne.s32.totalorder %s221, %s222
      %p234 = scmp.eq.s32.totalorder %s34, 1
      %p235 = por %p233, %p234
      %p237 = scmp.ne.s32.totalorder %s222, %s236
      %p238 = scmp.eq.s32.totalorder %s34, 0
      %p239 = por %p237, %p238
      %s241 = sadd.s32 %s240, 1
      %p244 = scmp.eq.s32.totalorder %s28, 1
      %p245 = scmp.ne.s32.totalorder %s240, %s242
      %p246 = scmp.eq.s32.totalorder %s28, 0
      %p247 = por %p245, %p246
      %p248 = scmp.ne.s32.totalorder %s240, %s242
      %p249 = scmp.eq.s32.totalorder %s33, 1
      %p250 = por %p248, %p249
      %p251 = scmp.ne.s32.totalorder %s242, %s243
      %p252 = scmp.eq.s32.totalorder %s33, 0
      %p253 = por %p251, %p252
      %p254 = scmp.ne.s32.totalorder %s242, %s243
      %p255 = scmp.eq.s32.totalorder %s34, 1
      %p256 = por %p254, %p255
      %p258 = scmp.ne.s32.totalorder %s243, %s257
      %p259 = scmp.eq.s32.totalorder %s34, 0
      %p260 = por %p258, %p259
      %s262 = sadd.s32 %s261, 1
      %p265 = scmp.eq.s32.totalorder %s28, 1
      %p266 = scmp.ne.s32.totalorder %s261, %s263
      %p267 = scmp.eq.s32.totalorder %s28, 0
      %p268 = por %p266, %p267
      %p269 = scmp.ne.s32.totalorder %s261, %s263
      %p270 = scmp.eq.s32.totalorder %s33, 1
      %p271 = por %p269, %p270
      %p272 = scmp.ne.s32.totalorder %s263, %s264
      %p273 = scmp.eq.s32.totalorder %s33, 0
      %p274 = por %p272, %p273
      %p275 = scmp.ne.s32.totalorder %s263, %s264
      %p276 = scmp.eq.s32.totalorder %s34, 1
      %p277 = por %p275, %p276
      %p279 = scmp.ne.s32.totalorder %s264, %s278
      %p280 = scmp.eq.s32.totalorder %s34, 0
      %p281 = por %p279, %p280
      %s282 = ssub.s32 %s28, %s35
      %p283 = scmp.eq.s32.totalorder %s282, 0
      %s285 = sadd.s32 %s284, 1
      %s286 = scalar_select %p283, %s284, %s285
      %p289 = pneg %p283
      %p290 = scmp.eq.s32.totalorder %s28, 1
      %p291 = por %p289, %p290
      %p292 = scmp.ne.s32.totalorder %s284, %s287
      %p293 = scmp.eq.s32.totalorder %s28, 0
      %p294 = por %p292, %p293
      %p295 = scmp.ne.s32.totalorder %s284, %s287
      %p296 = scmp.eq.s32.totalorder %s33, 1
      %p297 = por %p295, %p296
      %p298 = scmp.ne.s32.totalorder %s287, %s288
      %p299 = scmp.eq.s32.totalorder %s33, 0
      %p300 = por %p298, %p299
      %p301 = scmp.ne.s32.totalorder %s287, %s288
      %p302 = scmp.eq.s32.totalorder %s34, 1
      %p303 = por %p301, %p302
      %p305 = scmp.ne.s32.totalorder %s288, %s304
      %p306 = scmp.eq.s32.totalorder %s34, 0
      %p307 = por %p305, %p306
      %p308 = scmp.le.s32.totalorder 1, %s28
      %p309 = scmp.lt.s32.totalorder %s28, 3
      %p310 = pnand %p308, %p309
      %p311 = pneg %p310
      // Predicated region
      $region9: #{tpu_custom_call.1} parent=5 // pred_check
        _
      $region10: #{tpu_custom_call.1} parent=5 // pred_check_branch
        %313 = sbr.rel (%p310) target = $region12
      $region11: #{tpu_custom_call.1} parent=5 // pred_region
        %s314 = ssub.s32 %s28, 1
        // Predicated region
        $region13: #{tpu_custom_call.1} parent=11 // pred_check
          %p315 = pneg %p127
        $region14: #{tpu_custom_call.1} parent=11 // pred_check_branch
          %317 = sbr.rel (%p315) target = $region16
        $region15: #{tpu_custom_call.1} parent=11 // pred_region
          %s319 = ssub.s32 512, 512
          %320 = vsyncadd [#allocation9], %s319
          %s321 = sshll.u32 [#allocation8], 4
          %s322 = int_to_ptr.vmem [resolvable:$true] %s321
          %327 = dma.hbm_to_vmem [thread:$0]  %s3, 512, %s322, [#allocation9], 128, 128, 8
        $region16: #{tpu_custom_call.1} parent=11 // pred_fallthru
          _
        // Predicated region
        $region17: #{tpu_custom_call.1} parent=11 // pred_check
          %p328 = pneg %p148
        $region18: #{tpu_custom_call.1} parent=11 // pred_check_branch
          %330 = sbr.rel (%p328) target = $region20
        $region19: #{tpu_custom_call.1} parent=11 // pred_region
          _
        $region20: #{tpu_custom_call.1} parent=11 // pred_fallthru
          _
        // Predicated region
        $region21: #{tpu_custom_call.1} parent=11 // pred_check
          %p331 = pneg %p169
        $region22: #{tpu_custom_call.1} parent=11 // pred_check_branch
          %333 = sbr.rel (%p331) target = $region24
        $region23: #{tpu_custom_call.1} parent=11 // pred_region
          %s335 = ssub.s32 512, 512
          %336 = vsyncadd [#allocation9], %s335
          %s337 = sshll.u32 [#allocation10], 4
          %s338 = int_to_ptr.vmem [resolvable:$true] %s337
          %343 = dma.hbm_to_vmem [thread:$0]  %s5, 512, %s338, [#allocation9], 128, 128, 8
        $region24: #{tpu_custom_call.1} parent=11 // pred_fallthru
          _
        // Predicated region
        $region25: #{tpu_custom_call.1} parent=11 // pred_check
          %p344 = pneg %p190
        $region26: #{tpu_custom_call.1} parent=11 // pred_check_branch
          %346 = sbr.rel (%p344) target = $region28
        $region27: #{tpu_custom_call.1} parent=11 // pred_region
          _
        $region28: #{tpu_custom_call.1} parent=11 // pred_fallthru
          _
        // Predicated region
        $region29: #{tpu_custom_call.1} parent=11 // pred_check
          %p347 = pneg %p211
        $region30: #{tpu_custom_call.1} parent=11 // pred_check_branch
          %349 = sbr.rel (%p347) target = $region32
        $region31: #{tpu_custom_call.1} parent=11 // pred_region
          %s351 = ssub.s32 512, 512
          %352 = vsyncadd [#allocation12], %s351
          %s353 = sshll.u32 [#allocation11], 4
          %s354 = int_to_ptr.vmem [resolvable:$true] %s353
          %359 = dma.hbm_to_vmem [thread:$0]  %s7, 512, %s354, [#allocation12], 128, 128, 8
        $region32: #{tpu_custom_call.1} parent=11 // pred_fallthru
          _
        // Predicated region
        $region33: #{tpu_custom_call.1} parent=11 // pred_check
          %p360 = pneg %p232
        $region34: #{tpu_custom_call.1} parent=11 // pred_check_branch
          %362 = sbr.rel (%p360) target = $region36
        $region35: #{tpu_custom_call.1} parent=11 // pred_region
          %s364 = ssub.s32 16, 16
          %365 = vsyncadd [#allocation12], %s364
          %s367 = sshll.u32 [#allocation13], 4
          %s368 = int_to_ptr.vmem [resolvable:$true] %s367
          %370 = dma.hbm_to_vmem [thread:$0]  %s8, 16, %s368, [#allocation12]
        $region36: #{tpu_custom_call.1} parent=11 // pred_fallthru
          _
        // Predicated region
        $region37: #{tpu_custom_call.1} parent=11 // pred_check
          %p371 = pneg %p253
        $region38: #{tpu_custom_call.1} parent=11 // pred_check_branch
          %373 = sbr.rel (%p371) target = $region40
        $region39: #{tpu_custom_call.1} parent=11 // pred_region
          _
        $region40: #{tpu_custom_call.1} parent=11 // pred_fallthru
          _
        // Predicated region
        $region41: #{tpu_custom_call.1} parent=11 // pred_check
          %p374 = pneg %p274
        $region42: #{tpu_custom_call.1} parent=11 // pred_check_branch
          %376 = sbr.rel (%p374) target = $region44
        $region43: #{tpu_custom_call.1} parent=11 // pred_region
          _
        $region44: #{tpu_custom_call.1} parent=11 // pred_fallthru
          _
      $region12: #{tpu_custom_call.1} parent=5 // pred_fallthru
        _
      %p377 = scmp.lt.s32.totalorder %s28, 2
      // Predicated region
      $region45: #{tpu_custom_call.1} parent=5 // pred_check
        %p378 = pneg %p377
      $region46: #{tpu_custom_call.1} parent=5 // pred_check_branch
        %380 = sbr.rel (%p378) target = $region48
      $region47: #{tpu_custom_call.1} parent=5 // pred_region
        // Predicated region
        $region49: #{tpu_custom_call.1} parent=47 // pred_check
          %p381 = pneg %p48
        $region50: #{tpu_custom_call.1} parent=47 // pred_check_branch
          %383 = sbr.rel (%p381) target = $region52
        $region51: #{tpu_custom_call.1} parent=47 // pred_region
          %s384 = sand.u32 %s38, 1
          %s385 = scalar_lea.sflag [#allocation3], %s384
          %s386 = sand.u32 %s38, 1
          %s387 = smul.addr %s386, 8
          %s388 = scalar_lea.vmem [#allocation2], %s387
          %s390 = ssub.s32 128, 128
          %391 = vsyncadd %s385, %s390
          %s392 = smul.addr %s28, 128
          %s393 = scalar_lea.hbm %s0, %s392
          %s395 = sshll.u32 %s388, 4
          %s396 = int_to_ptr.vmem [resolvable:$true] %s395
          %398 = dma.hbm_to_vmem [thread:$0]  %s393, 128, %s396, %s385
        $region52: #{tpu_custom_call.1} parent=47 // pred_fallthru
          _
        // Predicated region
        $region53: #{tpu_custom_call.1} parent=47 // pred_check
          %p399 = pneg %p74
        $region54: #{tpu_custom_call.1} parent=47 // pred_check_branch
          %401 = sbr.rel (%p399) target = $region56
        $region55: #{tpu_custom_call.1} parent=47 // pred_region
          %s402 = sand.u32 %s28, 1
          %s403 = scalar_lea.sflag [#allocation6], %s402
          %s404 = sand.u32 %s64, 1
          %s405 = smul.addr %s404, 8
          %s406 = scalar_lea.vmem [#allocation5], %s405
          %s408 = ssub.s32 128, 128
          %409 = vsyncadd %s403, %s408
          %s410 = smul.addr %s28, 128
          %s411 = scalar_lea.hbm %s1, %s410
          %s413 = sshll.u32 %s406, 4
          %s414 = int_to_ptr.vmem [resolvable:$true] %s413
          %416 = dma.hbm_to_vmem [thread:$0]  %s411, 128, %s414, %s403
        $region56: #{tpu_custom_call.1} parent=47 // pred_fallthru
          _
        // Predicated region
        $region57: #{tpu_custom_call.1} parent=47 // pred_check
          %p417 = pneg %p100
        $region58: #{tpu_custom_call.1} parent=47 // pred_check_branch
          %419 = sbr.rel (%p417) target = $region60
        $region59: #{tpu_custom_call.1} parent=47 // pred_region
          %s420 = sand.u32 %s28, 1
          %s421 = scalar_lea.sflag [#allocation6], %s420
          %s422 = sand.u32 %s90, 1
          %s423 = smul.addr %s422, 8
          %s424 = scalar_lea.vmem [#allocation7], %s423
          %s426 = ssub.s32 128, 128
          %427 = vsyncadd %s421, %s426
          %s428 = smul.addr %s28, 128
          %s429 = scalar_lea.hbm %s2, %s428
          %s431 = sshll.u32 %s424, 4
          %s432 = int_to_ptr.vmem [resolvable:$true] %s431
          %434 = dma.hbm_to_vmem [thread:$0]  %s429, 128, %s432, %s421
        $region60: #{tpu_custom_call.1} parent=47 // pred_fallthru
          _
      $region48: #{tpu_custom_call.1} parent=5 // pred_fallthru
        _
      %p435 = scmp.le.s32.totalorder 1, %s28
      %p436 = scmp.lt.s32.totalorder %s28, 3
      %p437 = pnand %p435, %p436
      %p438 = pneg %p437
      // Predicated region
      $region61: #{tpu_custom_call.1} parent=5 // pred_check
        _
      $region62: #{tpu_custom_call.1} parent=5 // pred_check_branch
        %440 = sbr.rel (%p437) target = $region64
      $region63: #{tpu_custom_call.1} parent=5 // pred_region
        %s441 = ssub.s32 %s28, 1
        %s442 = sand.u32 %s41, 1
        %s443 = scalar_lea.sflag [#allocation3], %s442
        %s444 = sand.u32 %s41, 1
        %s445 = smul.addr %s444, 8
        %s446 = scalar_lea.vmem [#allocation2], %s445
        // Predicated region
        $region65: #{tpu_custom_call.1} parent=63 // pred_check
          %p447 = pneg %p54
        $region66: #{tpu_custom_call.1} parent=63 // pred_check_branch
          %449 = sbr.rel (%p447) target = $region68
        $region67: #{tpu_custom_call.1} parent=63 // pred_region
          %450 = dma.done %s443, 128
        $region68: #{tpu_custom_call.1} parent=63 // pred_fallthru
          _
        %s451 = sand.u32 %s33, 1
        %s452 = scalar_lea.sflag [#allocation6], %s451
        %s453 = sand.u32 %s67, 1
        %s454 = smul.addr %s453, 8
        %s455 = scalar_lea.vmem [#allocation5], %s454
        // Predicated region
        $region69: #{tpu_custom_call.1} parent=63 // pred_check
          %p456 = pneg %p80
        $region70: #{tpu_custom_call.1} parent=63 // pred_check_branch
          %458 = sbr.rel (%p456) target = $region72
        $region71: #{tpu_custom_call.1} parent=63 // pred_region
          %459 = dma.done %s452, 128
        $region72: #{tpu_custom_call.1} parent=63 // pred_fallthru
          _
        %s460 = sand.u32 %s33, 1
        %s461 = scalar_lea.sflag [#allocation6], %s460
        %s462 = sand.u32 %s93, 1
        %s463 = smul.addr %s462, 8
        %s464 = scalar_lea.vmem [#allocation7], %s463
        // Predicated region
        $region73: #{tpu_custom_call.1} parent=63 // pred_check
          %p465 = pneg %p106
        $region74: #{tpu_custom_call.1} parent=63 // pred_check_branch
          %467 = sbr.rel (%p465) target = $region76
        $region75: #{tpu_custom_call.1} parent=63 // pred_region
          %468 = dma.done %s461, 128
        $region76: #{tpu_custom_call.1} parent=63 // pred_fallthru
          _
        // Predicated region
        $region77: #{tpu_custom_call.1} parent=63 // pred_check
          %p469 = pneg %p127
        $region78: #{tpu_custom_call.1} parent=63 // pred_check_branch
          %471 = sbr.rel (%p469) target = $region80
        $region79: #{tpu_custom_call.1} parent=63 // pred_region
          %472 = dma.done [#allocation9], 512
        $region80: #{tpu_custom_call.1} parent=63 // pred_fallthru
          _
        // Predicated region
        $region81: #{tpu_custom_call.1} parent=63 // pred_check
          %p473 = pneg %p169
        $region82: #{tpu_custom_call.1} parent=63 // pred_check_branch
          %475 = sbr.rel (%p473) target = $region84
        $region83: #{tpu_custom_call.1} parent=63 // pred_region
          %476 = dma.done [#allocation9], 512
        $region84: #{tpu_custom_call.1} parent=63 // pred_fallthru
          _
        // Predicated region
        $region85: #{tpu_custom_call.1} parent=63 // pred_check
          %p477 = pneg %p211
        $region86: #{tpu_custom_call.1} parent=63 // pred_check_branch
          %479 = sbr.rel (%p477) target = $region88
        $region87: #{tpu_custom_call.1} parent=63 // pred_region
          %480 = dma.done [#allocation12], 512
        $region88: #{tpu_custom_call.1} parent=63 // pred_fallthru
          _
        // Predicated region
        $region89: #{tpu_custom_call.1} parent=63 // pred_check
          %p481 = pneg %p232
        $region90: #{tpu_custom_call.1} parent=63 // pred_check_branch
          %483 = sbr.rel (%p481) target = $region92
        $region91: #{tpu_custom_call.1} parent=63 // pred_region
          %484 = dma.done [#allocation12], 16
        $region92: #{tpu_custom_call.1} parent=63 // pred_fallthru
          _
        %s485 = sand.u32 %s41, 1
        %s486 = scalar_lea.sflag [#allocation3], %s485
        %s487 = sand.u32 %s41, 1
        %s488 = smul.addr %s487, 8
        %s489 = scalar_lea.vmem [#allocation2], %s488
        %p490 = pneg %p54
        %p491 = pneg %p51
        %s492 = sand.u32 %s33, 1
        %s493 = scalar_lea.sflag [#allocation6], %s492
        %s494 = sand.u32 %s67, 1
        %s495 = smul.addr %s494, 8
        %s496 = scalar_lea.vmem [#allocation5], %s495
        %p497 = pneg %p80
        %p498 = pneg %p77
        %s499 = sand.u32 %s33, 1
        %s500 = scalar_lea.sflag [#allocation6], %s499
        %s501 = sand.u32 %s93, 1
        %s502 = smul.addr %s501, 8
        %s503 = scalar_lea.vmem [#allocation7], %s502
        %p504 = pneg %p106
        %p505 = pneg %p103
        %p506 = pneg %p127
        %p507 = pneg %p124
        %p508 = pneg %p148
        %p509 = pneg %p145
        %p510 = pneg %p169
        %p511 = pneg %p166
        %p512 = pneg %p190
        %p513 = pneg %p187
        %p514 = pneg %p211
        %p515 = pneg %p208
        %p516 = pneg %p232
        %p517 = pneg %p229
        %p518 = pneg %p253
        %p519 = pneg %p250
        %p520 = pneg %p274
        %p521 = pneg %p271
        %p522 = pneg %p300
        %p523 = pneg %p297
        %s524 = sand.u32 %s287, 1
        %s525 = scalar_lea.sflag [#allocation4], %s524
        %s526 = sand.u32 %s287, 1
        %s527 = smul.addr %s526, 8
        %s528 = scalar_lea.vmem [#allocation14], %s527
        %v529 = vld [vmem:[%s446] sm:$0xff]
        %v530 = vld [vmem:[%s455] sm:$0xff]
        %v531 = vld [vmem:[%s464] sm:$0xff]
        %v532 = vld [vmem:[#allocation8] sm:$0xff]
        %v533 = vld [vmem:[#allocation8 + $0x8] sm:$0xff]
        %v534 = vld [vmem:[#allocation8 + $0x10] sm:$0xff]
        %v535 = vld [vmem:[#allocation8 + $0x18] sm:$0xff]
        %v536 = vld [vmem:[%s4] sm:$0x1]
        %v538 = vlaneseq
        %v539 = vshrl.u32 %v538, 7
        %v540 = vsub.s32 0, %v539
        %v541 = vrot.slane %v536, %v540
        %vm543 = vcmask 261120
        %v545 = vsel %vm543, %v529, 0
        %547 = vmatprep.subr.mxu0 0.0
        %548 = vmatpush1.msra.mxu0 %v532
        %549 = vmatprep.subr.mxu0 0.0
        %550 = vmatpush1.msra.mxu0 %v533
        %551 = vmatprep.subr.mxu0 0.0
        %552 = vmatpush1.msra.mxu0 %v534
        %553 = vmatprep.subr.mxu0 0.0
        %554 = vmatpush1.msra.mxu0 %v535
        %555 = vmatprep.subr.mxu0 0.0
        %556 = vmatpush1.msra.mxu0 0.0
        %557 = vmatprep.subr.mxu0 0.0
        %558 = vmatpush1.msra.mxu0 0.0
        %559 = vmatprep.subr.mxu0 0.0
        %560 = vmatpush1.msra.mxu0 0.0
        %561 = vmatprep.subr.mxu0 0.0
        %562 = vmatpush1.msra.mxu0 0.0
        %563 = vmatprep.subr.mxu0 0.0
        %564 = vmatpush1.msra.mxu0 0.0
        %565 = vmatprep.subr.mxu0 0.0
        %566 = vmatpush1.msra.mxu0 0.0
        %567 = vmatprep.subr.mxu0 0.0
        %568 = vmatpush1.msra.mxu0 0.0
        %569 = vmatprep.subr.mxu0 0.0
        %570 = vmatpush1.msra.mxu0 0.0
        %571 = vmatprep.subr.mxu0 0.0
        %572 = vmatpush1.msra.mxu0 0.0
        %573 = vmatprep.subr.mxu0 0.0
        %574 = vmatpush1.msra.mxu0 0.0
        %575 = vmatprep.subr.mxu0 0.0
        %576 = vmatpush1.msra.mxu0 0.0
        %577 = vmatprep.subr.mxu0 0.0
        %578 = vmatpush1.msra.mxu0 0.0
        %579 = vmatprep.subr.mxu0 0.0
        %580 = vmatpush1.msra.mxu0 0.0
        %581 = vmatprep.subr.mxu0 0.0
        %582 = vmatpush1.msra.mxu0 0.0
        %583 = vmatprep.subr.mxu0 0.0
        %584 = vmatpush1.msra.mxu0 0.0
        %585 = vmatprep.subr.mxu0 0.0
        %586 = vmatpush1.msra.mxu0 0.0
        %587 = vmatprep.subr.mxu0 0.0
        %588 = vmatpush1.msra.mxu0 0.0
        %589 = vmatprep.subr.mxu0 0.0
        %590 = vmatpush1.msra.mxu0 0.0
        %591 = vmatprep.subr.mxu0 0.0
        %592 = vmatpush1.msra.mxu0 0.0
        %593 = vmatprep.subr.mxu0 0.0
        %594 = vmatpush1.msra.mxu0 0.0
        %595 = vmatprep.subr.mxu0 0.0
        %596 = vmatpush1.msra.mxu0 0.0
        %597 = vmatprep.subr.mxu0 0.0
        %598 = vmatpush1.msra.mxu0 0.0
        %599 = vmatprep.subr.mxu0 0.0
        %600 = vmatpush1.msra.mxu0 0.0
        %601 = vmatprep.subr.mxu0 0.0
        %602 = vmatpush1.msra.mxu0 0.0
        %603 = vmatprep.subr.mxu0 0.0
        %604 = vmatpush1.msra.mxu0 0.0
        %605 = vmatprep.subr.mxu0 0.0
        %606 = vmatpush1.msra.mxu0 0.0
        %607 = vmatprep.subr.mxu0 0.0
        %608 = vmatpush1.msra.mxu0 0.0
        %609 = vmatprep.subr.mxu0 0.0
        %610 = vmatpush1.msra.mxu0 0.0
        %611 = vmatprep.mubr.f32.mxu0 0.0
        %612 = vmatmul.mubr.f32.gmra.mrb[0].mxu0 %v545
        %v613 = vpop.f32.mrb[0].mxu0
        %v614 = vadd.f32 %v541, %v613
        %v615 = vpop.f32.mrb[0].mxu0
        %616 = vdwg.mxu0
        %v617 = vld [vmem:[#allocation10] sm:$0xff]
        %v618 = vld [vmem:[#allocation10 + $0x8] sm:$0xff]
        %v619 = vld [vmem:[#allocation10 + $0x10] sm:$0xff]
        %v620 = vld [vmem:[#allocation10 + $0x18] sm:$0xff]
        %v621 = vld [vmem:[%s6] sm:$0x1]
        %v623 = vlaneseq
        %v624 = vshrl.u32 %v623, 7
        %v625 = vsub.s32 0, %v624
        %v626 = vrot.slane %v621, %v625
        %v629 = vsel %vm543, %v530, 0
        %631 = vmatprep.subr.mxu0 0.0
        %632 = vmatpush1.msra.mxu0 %v617
        %633 = vmatprep.subr.mxu0 0.0
        %634 = vmatpush1.msra.mxu0 %v618
        %635 = vmatprep.subr.mxu0 0.0
        %636 = vmatpush1.msra.mxu0 %v619
        %637 = vmatprep.subr.mxu0 0.0
        %638 = vmatpush1.msra.mxu0 %v620
        %639 = vmatprep.subr.mxu0 0.0
        %640 = vmatpush1.msra.mxu0 0.0
        %641 = vmatprep.subr.mxu0 0.0
        %642 = vmatpush1.msra.mxu0 0.0
        %643 = vmatprep.subr.mxu0 0.0
        %644 = vmatpush1.msra.mxu0 0.0
        %645 = vmatprep.subr.mxu0 0.0
        %646 = vmatpush1.msra.mxu0 0.0
        %647 = vmatprep.subr.mxu0 0.0
        %648 = vmatpush1.msra.mxu0 0.0
        %649 = vmatprep.subr.mxu0 0.0
        %650 = vmatpush1.msra.mxu0 0.0
        %651 = vmatprep.subr.mxu0 0.0
        %652 = vmatpush1.msra.mxu0 0.0
        %653 = vmatprep.subr.mxu0 0.0
        %654 = vmatpush1.msra.mxu0 0.0
        %655 = vmatprep.subr.mxu0 0.0
        %656 = vmatpush1.msra.mxu0 0.0
        %657 = vmatprep.subr.mxu0 0.0
        %658 = vmatpush1.msra.mxu0 0.0
        %659 = vmatprep.subr.mxu0 0.0
        %660 = vmatpush1.msra.mxu0 0.0
        %661 = vmatprep.subr.mxu0 0.0
        %662 = vmatpush1.msra.mxu0 0.0
        %663 = vmatprep.subr.mxu0 0.0
        %664 = vmatpush1.msra.mxu0 0.0
        %665 = vmatprep.subr.mxu0 0.0
        %666 = vmatpush1.msra.mxu0 0.0
        %667 = vmatprep.subr.mxu0 0.0
        %668 = vmatpush1.msra.mxu0 0.0
        %669 = vmatprep.subr.mxu0 0.0
        %670 = vmatpush1.msra.mxu0 0.0
        %671 = vmatprep.subr.mxu0 0.0
        %672 = vmatpush1.msra.mxu0 0.0
        %673 = vmatprep.subr.mxu0 0.0
        %674 = vmatpush1.msra.mxu0 0.0
        %675 = vmatprep.subr.mxu0 0.0
        %676 = vmatpush1.msra.mxu0 0.0
        %677 = vmatprep.subr.mxu0 0.0
        %678 = vmatpush1.msra.mxu0 0.0
        %679 = vmatprep.subr.mxu0 0.0
        %680 = vmatpush1.msra.mxu0 0.0
        %681 = vmatprep.subr.mxu0 0.0
        %682 = vmatpush1.msra.mxu0 0.0
        %683 = vmatprep.subr.mxu0 0.0
        %684 = vmatpush1.msra.mxu0 0.0
        %685 = vmatprep.subr.mxu0 0.0
        %686 = vmatpush1.msra.mxu0 0.0
        %687 = vmatprep.subr.mxu0 0.0
        %688 = vmatpush1.msra.mxu0 0.0
        %689 = vmatprep.subr.mxu0 0.0
        %690 = vmatpush1.msra.mxu0 0.0
        %691 = vmatprep.subr.mxu0 0.0
        %692 = vmatpush1.msra.mxu0 0.0
        %693 = vmatprep.subr.mxu0 0.0
        %694 = vmatpush1.msra.mxu0 0.0
        %695 = vmatprep.mubr.f32.mxu0 0.0
        %696 = vmatmul.mubr.f32.gmra.mrb[0].mxu0 %v629
        %v697 = vpop.f32.mrb[0].mxu0
        %v698 = vadd.f32 %v626, %v697
        %v699 = vpop.f32.mrb[0].mxu0
        %700 = vdwg.mxu0
        %v701 = vld [vmem:[#allocation11] sm:$0xff]
        %v702 = vld [vmem:[#allocation11 + $0x8] sm:$0xff]
        %v703 = vld [vmem:[#allocation11 + $0x10] sm:$0xff]
        %v704 = vld [vmem:[#allocation11 + $0x18] sm:$0xff]
        %v705 = vld [vmem:[#allocation13] sm:$0x1]
        %v707 = vlaneseq
        %v708 = vshrl.u32 %v707, 7
        %v709 = vsub.s32 0, %v708
        %v710 = vrot.slane %v705, %v709
        %v713 = vsel %vm543, %v531, 0
        %715 = vmatprep.subr.mxu0 0.0
        %716 = vmatpush1.msra.mxu0 %v701
        %717 = vmatprep.subr.mxu0 0.0
        %718 = vmatpush1.msra.mxu0 %v702
        %719 = vmatprep.subr.mxu0 0.0
        %720 = vmatpush1.msra.mxu0 %v703
        %721 = vmatprep.subr.mxu0 0.0
        %722 = vmatpush1.msra.mxu0 %v704
        %723 = vmatprep.subr.mxu0 0.0
        %724 = vmatpush1.msra.mxu0 0.0
        %725 = vmatprep.subr.mxu0 0.0
        %726 = vmatpush1.msra.mxu0 0.0
        %727 = vmatprep.subr.mxu0 0.0
        %728 = vmatpush1.msra.mxu0 0.0
        %729 = vmatprep.subr.mxu0 0.0
        %730 = vmatpush1.msra.mxu0 0.0
        %731 = vmatprep.subr.mxu0 0.0
        %732 = vmatpush1.msra.mxu0 0.0
        %733 = vmatprep.subr.mxu0 0.0
        %734 = vmatpush1.msra.mxu0 0.0
        %735 = vmatprep.subr.mxu0 0.0
        %736 = vmatpush1.msra.mxu0 0.0
        %737 = vmatprep.subr.mxu0 0.0
        %738 = vmatpush1.msra.mxu0 0.0
        %739 = vmatprep.subr.mxu0 0.0
        %740 = vmatpush1.msra.mxu0 0.0
        %741 = vmatprep.subr.mxu0 0.0
        %742 = vmatpush1.msra.mxu0 0.0
        %743 = vmatprep.subr.mxu0 0.0
        %744 = vmatpush1.msra.mxu0 0.0
        %745 = vmatprep.subr.mxu0 0.0
        %746 = vmatpush1.msra.mxu0 0.0
        %747 = vmatprep.subr.mxu0 0.0
        %748 = vmatpush1.msra.mxu0 0.0
        %749 = vmatprep.subr.mxu0 0.0
        %750 = vmatpush1.msra.mxu0 0.0
        %751 = vmatprep.subr.mxu0 0.0
        %752 = vmatpush1.msra.mxu0 0.0
        %753 = vmatprep.subr.mxu0 0.0
        %754 = vmatpush1.msra.mxu0 0.0
        %755 = vmatprep.subr.mxu0 0.0
        %756 = vmatpush1.msra.mxu0 0.0
        %757 = vmatprep.subr.mxu0 0.0
        %758 = vmatpush1.msra.mxu0 0.0
        %759 = vmatprep.subr.mxu0 0.0
        %760 = vmatpush1.msra.mxu0 0.0
        %761 = vmatprep.subr.mxu0 0.0
        %762 = vmatpush1.msra.mxu0 0.0
        %763 = vmatprep.subr.mxu0 0.0
        %764 = vmatpush1.msra.mxu0 0.0
        %765 = vmatprep.subr.mxu0 0.0
        %766 = vmatpush1.msra.mxu0 0.0
        %767 = vmatprep.subr.mxu0 0.0
        %768 = vmatpush1.msra.mxu0 0.0
        %769 = vmatprep.subr.mxu0 0.0
        %770 = vmatpush1.msra.mxu0 0.0
        %771 = vmatprep.subr.mxu0 0.0
        %772 = vmatpush1.msra.mxu0 0.0
        %773 = vmatprep.subr.mxu0 0.0
        %774 = vmatpush1.msra.mxu0 0.0
        %775 = vmatprep.subr.mxu0 0.0
        %776 = vmatpush1.msra.mxu0 0.0
        %777 = vmatprep.subr.mxu0 0.0
        %778 = vmatpush1.msra.mxu0 0.0
        %779 = vmatprep.mubr.f32.mxu0 0.0
        %780 = vmatmul.mubr.f32.gmra.mrb[0].mxu0 %v713
        %v781 = vpop.f32.mrb[0].mxu0
        %v782 = vadd.f32 %v710, %v781
        %v783 = vpop.f32.mrb[0].mxu0
        %784 = vdwg.mxu0
        %v785 = vlaneseq
        %v786 = vand.u32 %v785, 127
        %vm787 = vcmask 64512
        %v789 = vsel %vm787, %v614, 0
        %v792 = vsel %vm787, %v698, 0
        %794 = vmatprep.subr.mxu0 0.0
        %795 = vmatpush1.xpose.msra.mxu0 %v792
        %796 = vmatprep.subr.mxu0 0.0
        %797 = vmatpush1.xpose.msra.mxu0 0.0
        %798 = vmatprep.subr.mxu0 0.0
        %799 = vmatpush1.xpose.msra.mxu0 0.0
        %800 = vmatprep.subr.mxu0 0.0
        %801 = vmatpush1.xpose.msra.mxu0 0.0
        %802 = vmatprep.subr.mxu0 0.0
        %803 = vmatpush1.xpose.msra.mxu0 0.0
        %804 = vmatprep.subr.mxu0 0.0
        %805 = vmatpush1.xpose.msra.mxu0 0.0
        %806 = vmatprep.subr.mxu0 0.0
        %807 = vmatpush1.xpose.msra.mxu0 0.0
        %808 = vmatprep.subr.mxu0 0.0
        %809 = vmatpush1.xpose.msra.mxu0 0.0
        %810 = vmatprep.subr.mxu0 0.0
        %811 = vmatpush1.xpose.msra.mxu0 0.0
        %812 = vmatprep.subr.mxu0 0.0
        %813 = vmatpush1.xpose.msra.mxu0 0.0
        %814 = vmatprep.subr.mxu0 0.0
        %815 = vmatpush1.xpose.msra.mxu0 0.0
        %816 = vmatprep.subr.mxu0 0.0
        %817 = vmatpush1.xpose.msra.mxu0 0.0
        %818 = vmatprep.subr.mxu0 0.0
        %819 = vmatpush1.xpose.msra.mxu0 0.0
        %820 = vmatprep.subr.mxu0 0.0
        %821 = vmatpush1.xpose.msra.mxu0 0.0
        %822 = vmatprep.subr.mxu0 0.0
        %823 = vmatpush1.xpose.msra.mxu0 0.0
        %824 = vmatprep.subr.mxu0 0.0
        %825 = vmatpush1.xpose.msra.mxu0 0.0
        %826 = vmatprep.subr.mxu0 0.0
        %827 = vmatpush1.xpose.msra.mxu0 0.0
        %828 = vmatprep.subr.mxu0 0.0
        %829 = vmatpush1.xpose.msra.mxu0 0.0
        %830 = vmatprep.subr.mxu0 0.0
        %831 = vmatpush1.xpose.msra.mxu0 0.0
        %832 = vmatprep.subr.mxu0 0.0
        %833 = vmatpush1.xpose.msra.mxu0 0.0
        %834 = vmatprep.subr.mxu0 0.0
        %835 = vmatpush1.xpose.msra.mxu0 0.0
        %836 = vmatprep.subr.mxu0 0.0
        %837 = vmatpush1.xpose.msra.mxu0 0.0
        %838 = vmatprep.subr.mxu0 0.0
        %839 = vmatpush1.xpose.msra.mxu0 0.0
        %840 = vmatprep.subr.mxu0 0.0
        %841 = vmatpush1.xpose.msra.mxu0 0.0
        %842 = vmatprep.subr.mxu0 0.0
        %843 = vmatpush1.xpose.msra.mxu0 0.0
        %844 = vmatprep.subr.mxu0 0.0
        %845 = vmatpush1.xpose.msra.mxu0 0.0
        %846 = vmatprep.subr.mxu0 0.0
        %847 = vmatpush1.xpose.msra.mxu0 0.0
        %848 = vmatprep.subr.mxu0 0.0
        %849 = vmatpush1.xpose.msra.mxu0 0.0
        %850 = vmatprep.subr.mxu0 0.0
        %851 = vmatpush1.xpose.msra.mxu0 0.0
        %852 = vmatprep.subr.mxu0 0.0
        %853 = vmatpush1.xpose.msra.mxu0 0.0
        %854 = vmatprep.subr.mxu0 0.0
        %855 = vmatpush1.xpose.msra.mxu0 0.0
        %856 = vmatprep.subr.mxu0 0.0
        %857 = vmatpush1.xpose.msra.mxu0 0.0
        %858 = vmatprep.mubr.f32.mxu0 0.0
        %859 = vmatmul.mubr.f32.gmra.mrb[0].mxu0 %v789
        %v860 = vpop.f32.mrb[0].mxu0
        %v861 = vadd.f32 0.0, %v860
        %v862 = vpop.f32.mrb[0].mxu0
        %863 = vdwg.mxu0
        %v864 = vmul.f32 %v861, 0.35355338
        %v865 = vsel %vm787, %v864, -inf
        %866 = vmax.xlane.f32.xlu0 %v865
        %v867 = vpop.xlane.xlu0 %866
        %v868 = vsub.f32 %v864, %v867
        %v869 = vmul.f32 %v868, 1.442695
        %v870 = vpow.pop %v869
        %v871 = vsel %vm787, %v870, 0.0
        %872 = vadd.xlane.f32.xlu0 %v871
        %v873 = vpop.xlane.xlu0 %872
        %v874 = vrcp.pop %v873
        %v875 = vmul.f32 1.0, %v874
        %v876 = vmul.f32 %v870, %v875
        %v877 = vsel %vm787, %v876, 0.0
        %v878 = vrot.slane %v877, 4
        %v879 = vadd.f32 %v877, %v878
        %v880 = vrot.slane %v879, 2
        %v881 = vadd.f32 %v879, %v880
        %v882 = vrot.slane %v881, 1
        %v883 = vadd.f32 %v881, %v882
        %vm884 = vcmp.gt.f32.partialorder 1.0, 0.0
        %v885 = vsel %vm884, %v883, inf
        %v886 = vsel %vm787, %v885, inf
        %887 = vmin.xlane.f32.xlu0 %v886
        %v888 = vpop.xlane.xlu0 %887
        %vm889 = vcmp.eq.f32.partialorder %v885, %v888
        %v890 = vsel %vm889, %v786, 4294967295
        %v891 = vsel %vm787, %v890, 2147483648
        %v892 = vand.u32 %v891, 65535
        %v893 = vshra.s32 %v891, 16
        %v894 = vcvt.s32.f32 %v892
        %v895 = vcvt.s32.f32 %v893
        %896 = vmax.xlane.f32.xlu0 %v895
        %v897 = vpop.xlane.xlu0 %896
        %vm898 = vcmp.eq.f32.partialorder %v895, %v897
        %v899 = vsel %vm898, %v894, -inf
        %900 = vmax.xlane.f32.xlu0 %v899
        %v901 = vpop.xlane.xlu0 %900
        %v902 = vcvt.f32.s32 %v901
        %v903 = vcvt.f32.s32 %v897
        %v904 = vshll.u32 %v903, 16
        %v905 = vadd.s32 %v904, %v902
        %vm906 = vcmp.eq.s32.totalorder %v786, %v905
        %v907 = vsel %vm906, 0.0, 1.0
        %v908 = vmul.f32 %v876, %v907
        %v910 = vsel %vm787, %v908, 0
        %912 = vmatprep.subr.mxu0 0.0
        %913 = vmatpush1.msra.mxu0 %v782
        %914 = vmatprep.subr.mxu0 0.0
        %915 = vmatpush1.msra.mxu0 0.0
        %916 = vmatprep.subr.mxu0 0.0
        %917 = vmatpush1.msra.mxu0 0.0
        %918 = vmatprep.subr.mxu0 0.0
        %919 = vmatpush1.msra.mxu0 0.0
        %920 = vmatprep.subr.mxu0 0.0
        %921 = vmatpush1.msra.mxu0 0.0
        %922 = vmatprep.subr.mxu0 0.0
        %923 = vmatpush1.msra.mxu0 0.0
        %924 = vmatprep.subr.mxu0 0.0
        %925 = vmatpush1.msra.mxu0 0.0
        %926 = vmatprep.subr.mxu0 0.0
        %927 = vmatpush1.msra.mxu0 0.0
        %928 = vmatprep.subr.mxu0 0.0
        %929 = vmatpush1.msra.mxu0 0.0
        %930 = vmatprep.subr.mxu0 0.0
        %931 = vmatpush1.msra.mxu0 0.0
        %932 = vmatprep.subr.mxu0 0.0
        %933 = vmatpush1.msra.mxu0 0.0
        %934 = vmatprep.subr.mxu0 0.0
        %935 = vmatpush1.msra.mxu0 0.0
        %936 = vmatprep.subr.mxu0 0.0
        %937 = vmatpush1.msra.mxu0 0.0
        %938 = vmatprep.subr.mxu0 0.0
        %939 = vmatpush1.msra.mxu0 0.0
        %940 = vmatprep.subr.mxu0 0.0
        %941 = vmatpush1.msra.mxu0 0.0
        %942 = vmatprep.subr.mxu0 0.0
        %943 = vmatpush1.msra.mxu0 0.0
        %944 = vmatprep.subr.mxu0 0.0
        %945 = vmatpush1.msra.mxu0 0.0
        %946 = vmatprep.subr.mxu0 0.0
        %947 = vmatpush1.msra.mxu0 0.0
        %948 = vmatprep.subr.mxu0 0.0
        %949 = vmatpush1.msra.mxu0 0.0
        %950 = vmatprep.subr.mxu0 0.0
        %951 = vmatpush1.msra.mxu0 0.0
        %952 = vmatprep.subr.mxu0 0.0
        %953 = vmatpush1.msra.mxu0 0.0
        %954 = vmatprep.subr.mxu0 0.0
        %955 = vmatpush1.msra.mxu0 0.0
        %956 = vmatprep.subr.mxu0 0.0
        %957 = vmatpush1.msra.mxu0 0.0
        %958 = vmatprep.subr.mxu0 0.0
        %959 = vmatpush1.msra.mxu0 0.0
        %960 = vmatprep.subr.mxu0 0.0
        %961 = vmatpush1.msra.mxu0 0.0
        %962 = vmatprep.subr.mxu0 0.0
        %963 = vmatpush1.msra.mxu0 0.0
        %964 = vmatprep.subr.mxu0 0.0
        %965 = vmatpush1.msra.mxu0 0.0
        %966 = vmatprep.subr.mxu0 0.0
        %967 = vmatpush1.msra.mxu0 0.0
        %968 = vmatprep.subr.mxu0 0.0
        %969 = vmatpush1.msra.mxu0 0.0
        %970 = vmatprep.subr.mxu0 0.0
        %971 = vmatpush1.msra.mxu0 0.0
        %972 = vmatprep.subr.mxu0 0.0
        %973 = vmatpush1.msra.mxu0 0.0
        %974 = vmatprep.subr.mxu0 0.0
        %975 = vmatpush1.msra.mxu0 0.0
        %976 = vmatprep.mubr.f32.mxu0 0.0
        %977 = vmatmul.mubr.f32.gmra.mrb[0].mxu0 %v910
        %v978 = vpop.f32.mrb[0].mxu0
        %v979 = vadd.f32 0.0, %v978
        %v980 = vpop.f32.mrb[0].mxu0
        %981 = vdwg.mxu0
        %v982 = vld [vmem:[%s9] sm:$0xff]
        %983 = vrot.lane.b32.xlu0 %v614, 120
        %v984 = vpop.permute.xlu0 %983
        %985 = vrot.lane.b32.xlu0 %v698, 120
        %v986 = vpop.permute.xlu0 %985
        %v987 = vsel %vm787, %v984, 0
        %v989 = vsel %vm787, %v986, 0
        %991 = vmatprep.subr.mxu0 0.0
        %992 = vmatpush1.xpose.msra.mxu0 %v989
        %993 = vmatprep.subr.mxu0 0.0
        %994 = vmatpush1.xpose.msra.mxu0 0.0
        %995 = vmatprep.subr.mxu0 0.0
        %996 = vmatpush1.xpose.msra.mxu0 0.0
        %997 = vmatprep.subr.mxu0 0.0
        %998 = vmatpush1.xpose.msra.mxu0 0.0
        %999 = vmatprep.subr.mxu0 0.0
        %1000 = vmatpush1.xpose.msra.mxu0 0.0
        %1001 = vmatprep.subr.mxu0 0.0
        %1002 = vmatpush1.xpose.msra.mxu0 0.0
        %1003 = vmatprep.subr.mxu0 0.0
        %1004 = vmatpush1.xpose.msra.mxu0 0.0
        %1005 = vmatprep.subr.mxu0 0.0
        %1006 = vmatpush1.xpose.msra.mxu0 0.0
        %1007 = vmatprep.subr.mxu0 0.0
        %1008 = vmatpush1.xpose.msra.mxu0 0.0
        %1009 = vmatprep.subr.mxu0 0.0
        %1010 = vmatpush1.xpose.msra.mxu0 0.0
        %1011 = vmatprep.subr.mxu0 0.0
        %1012 = vmatpush1.xpose.msra.mxu0 0.0
        %1013 = vmatprep.subr.mxu0 0.0
        %1014 = vmatpush1.xpose.msra.mxu0 0.0
        %1015 = vmatprep.subr.mxu0 0.0
        %1016 = vmatpush1.xpose.msra.mxu0 0.0
        %1017 = vmatprep.subr.mxu0 0.0
        %1018 = vmatpush1.xpose.msra.mxu0 0.0
        %1019 = vmatprep.subr.mxu0 0.0
        %1020 = vmatpush1.xpose.msra.mxu0 0.0
        %1021 = vmatprep.subr.mxu0 0.0
        %1022 = vmatpush1.xpose.msra.mxu0 0.0
        %1023 = vmatprep.subr.mxu0 0.0
        %1024 = vmatpush1.xpose.msra.mxu0 0.0
        %1025 = vmatprep.subr.mxu0 0.0
        %1026 = vmatpush1.xpose.msra.mxu0 0.0
        %1027 = vmatprep.subr.mxu0 0.0
        %1028 = vmatpush1.xpose.msra.mxu0 0.0
        %1029 = vmatprep.subr.mxu0 0.0
        %1030 = vmatpush1.xpose.msra.mxu0 0.0
        %1031 = vmatprep.subr.mxu0 0.0
        %1032 = vmatpush1.xpose.msra.mxu0 0.0
        %1033 = vmatprep.subr.mxu0 0.0
        %1034 = vmatpush1.xpose.msra.mxu0 0.0
        %1035 = vmatprep.subr.mxu0 0.0
        %1036 = vmatpush1.xpose.msra.mxu0 0.0
        %1037 = vmatprep.subr.mxu0 0.0
        %1038 = vmatpush1.xpose.msra.mxu0 0.0
        %1039 = vmatprep.subr.mxu0 0.0
        %1040 = vmatpush1.xpose.msra.mxu0 0.0
        %1041 = vmatprep.subr.mxu0 0.0
        %1042 = vmatpush1.xpose.msra.mxu0 0.0
        %1043 = vmatprep.subr.mxu0 0.0
        %1044 = vmatpush1.xpose.msra.mxu0 0.0
        %1045 = vmatprep.subr.mxu0 0.0
        %1046 = vmatpush1.xpose.msra.mxu0 0.0
        %1047 = vmatprep.subr.mxu0 0.0
        %1048 = vmatpush1.xpose.msra.mxu0 0.0
        %1049 = vmatprep.subr.mxu0 0.0
        %1050 = vmatpush1.xpose.msra.mxu0 0.0
        %1051 = vmatprep.subr.mxu0 0.0
        %1052 = vmatpush1.xpose.msra.mxu0 0.0
        %1053 = vmatprep.subr.mxu0 0.0
        %1054 = vmatpush1.xpose.msra.mxu0 0.0
        %1055 = vmatprep.mubr.f32.mxu0 0.0
        %1056 = vmatmul.mubr.f32.gmra.mrb[0].mxu0 %v987
        %v1057 = vpop.f32.mrb[0].mxu0
        %v1058 = vadd.f32 0.0, %v1057
        %v1059 = vpop.f32.mrb[0].mxu0
        %1060 = vdwg.mxu0
        %v1061 = vmul.f32 %v1058, 0.35355338
        %v1062 = vsel %vm787, %v1061, -inf
        %1063 = vmax.xlane.f32.xlu0 %v1062
        %v1064 = vpop.xlane.xlu0 %1063
        %v1065 = vsub.f32 %v1061, %v1064
        %v1066 = vmul.f32 %v1065, 1.442695
        %v1067 = vpow.pop %v1066
        %v1068 = vsel %vm787, %v1067, 0.0
        %1069 = vadd.xlane.f32.xlu0 %v1068
        %v1070 = vpop.xlane.xlu0 %1069
        %v1071 = vrcp.pop %v1070
        %v1072 = vmul.f32 1.0, %v1071
        %v1073 = vmul.f32 %v1067, %v1072
        %v1074 = vsel %vm787, %v1073, 0.0
        %v1075 = vrot.slane %v1074, 4
        %v1076 = vadd.f32 %v1074, %v1075
        %v1077 = vrot.slane %v1076, 2
        %v1078 = vadd.f32 %v1076, %v1077
        %v1079 = vrot.slane %v1078, 1
        %v1080 = vadd.f32 %v1078, %v1079
        %v1081 = vsel %vm884, %v1080, inf
        %v1082 = vsel %vm787, %v1081, inf
        %1083 = vmin.xlane.f32.xlu0 %v1082
        %v1084 = vpop.xlane.xlu0 %1083
        %vm1085 = vcmp.eq.f32.partialorder %v1081, %v1084
        %v1086 = vsel %vm1085, %v786, 4294967295
        %v1087 = vsel %vm787, %v1086, 2147483648
        %v1088 = vand.u32 %v1087, 65535
        %v1089 = vshra.s32 %v1087, 16
        %v1090 = vcvt.s32.f32 %v1088
        %v1091 = vcvt.s32.f32 %v1089
        %1092 = vmax.xlane.f32.xlu0 %v1091
        %v1093 = vpop.xlane.xlu0 %1092
        %vm1094 = vcmp.eq.f32.partialorder %v1091, %v1093
        %v1095 = vsel %vm1094, %v1090, -inf
        %1096 = vmax.xlane.f32.xlu0 %v1095
        %v1097 = vpop.xlane.xlu0 %1096
        %v1098 = vcvt.f32.s32 %v1097
        %v1099 = vcvt.f32.s32 %v1093
        %v1100 = vshll.u32 %v1099, 16
        %v1101 = vadd.s32 %v1100, %v1098
        %vm1102 = vcmp.eq.s32.totalorder %v786, %v1101
        %v1103 = vsel %vm1102, 0.0, 1.0
        %v1104 = vmul.f32 %v1073, %v1103
        %1106 = vrot.lane.b32.xlu0 %v782, 120
        %v1107 = vpop.permute.xlu0 %1106
        %v1110 = vsel %vm787, %v1104, 0
        %1112 = vmatprep.subr.mxu0 0.0
        %1113 = vmatpush1.msra.mxu0 %v1107
        %1114 = vmatprep.subr.mxu0 0.0
        %1115 = vmatpush1.msra.mxu0 0.0
        %1116 = vmatprep.subr.mxu0 0.0
        %1117 = vmatpush1.msra.mxu0 0.0
        %1118 = vmatprep.subr.mxu0 0.0
        %1119 = vmatpush1.msra.mxu0 0.0
        %1120 = vmatprep.subr.mxu0 0.0
        %1121 = vmatpush1.msra.mxu0 0.0
        %1122 = vmatprep.subr.mxu0 0.0
        %1123 = vmatpush1.msra.mxu0 0.0
        %1124 = vmatprep.subr.mxu0 0.0
        %1125 = vmatpush1.msra.mxu0 0.0
        %1126 = vmatprep.subr.mxu0 0.0
        %1127 = vmatpush1.msra.mxu0 0.0
        %1128 = vmatprep.subr.mxu0 0.0
        %1129 = vmatpush1.msra.mxu0 0.0
        %1130 = vmatprep.subr.mxu0 0.0
        %1131 = vmatpush1.msra.mxu0 0.0
        %1132 = vmatprep.subr.mxu0 0.0
        %1133 = vmatpush1.msra.mxu0 0.0
        %1134 = vmatprep.subr.mxu0 0.0
        %1135 = vmatpush1.msra.mxu0 0.0
        %1136 = vmatprep.subr.mxu0 0.0
        %1137 = vmatpush1.msra.mxu0 0.0
        %1138 = vmatprep.subr.mxu0 0.0
        %1139 = vmatpush1.msra.mxu0 0.0
        %1140 = vmatprep.subr.mxu0 0.0
        %1141 = vmatpush1.msra.mxu0 0.0
        %1142 = vmatprep.subr.mxu0 0.0
        %1143 = vmatpush1.msra.mxu0 0.0
        %1144 = vmatprep.subr.mxu0 0.0
        %1145 = vmatpush1.msra.mxu0 0.0
        %1146 = vmatprep.subr.mxu0 0.0
        %1147 = vmatpush1.msra.mxu0 0.0
        %1148 = vmatprep.subr.mxu0 0.0
        %1149 = vmatpush1.msra.mxu0 0.0
        %1150 = vmatprep.subr.mxu0 0.0
        %1151 = vmatpush1.msra.mxu0 0.0
        %1152 = vmatprep.subr.mxu0 0.0
        %1153 = vmatpush1.msra.mxu0 0.0
        %1154 = vmatprep.subr.mxu0 0.0
        %1155 = vmatpush1.msra.mxu0 0.0
        %1156 = vmatprep.subr.mxu0 0.0
        %1157 = vmatpush1.msra.mxu0 0.0
        %1158 = vmatprep.subr.mxu0 0.0
        %1159 = vmatpush1.msra.mxu0 0.0
        %1160 = vmatprep.subr.mxu0 0.0
        %1161 = vmatpush1.msra.mxu0 0.0
        %1162 = vmatprep.subr.mxu0 0.0
        %1163 = vmatpush1.msra.mxu0 0.0
        %1164 = vmatprep.subr.mxu0 0.0
        %1165 = vmatpush1.msra.mxu0 0.0
        %1166 = vmatprep.subr.mxu0 0.0
        %1167 = vmatpush1.msra.mxu0 0.0
        %1168 = vmatprep.subr.mxu0 0.0
        %1169 = vmatpush1.msra.mxu0 0.0
        %1170 = vmatprep.subr.mxu0 0.0
        %1171 = vmatpush1.msra.mxu0 0.0
        %1172 = vmatprep.subr.mxu0 0.0
        %1173 = vmatpush1.msra.mxu0 0.0
        %1174 = vmatprep.subr.mxu0 0.0
        %1175 = vmatpush1.msra.mxu0 0.0
        %1176 = vmatprep.mubr.f32.mxu0 0.0
        %1177 = vmatmul.mubr.f32.gmra.mrb[0].mxu0 %v1110
        %v1178 = vpop.f32.mrb[0].mxu0
        %v1179 = vadd.f32 0.0, %v1178
        %v1180 = vpop.f32.mrb[0].mxu0
        %1181 = vdwg.mxu0
        %v1182 = vld [vmem:[%s9 + $0x8] sm:$0xff]
        %v1184 = vsel %vm787, %v1179, 0
        %1186 = vmatprep.subr.mxu0 0.0
        %1187 = vmatpush1.msra.mxu0 %v1182
        %1188 = vmatprep.subr.mxu0 0.0
        %1189 = vmatpush1.msra.mxu0 0.0
        %1190 = vmatprep.subr.mxu0 0.0
        %1191 = vmatpush1.msra.mxu0 0.0
        %1192 = vmatprep.subr.mxu0 0.0
        %1193 = vmatpush1.msra.mxu0 0.0
        %1194 = vmatprep.subr.mxu0 0.0
        %1195 = vmatpush1.msra.mxu0 0.0
        %1196 = vmatprep.subr.mxu0 0.0
        %1197 = vmatpush1.msra.mxu0 0.0
        %1198 = vmatprep.subr.mxu0 0.0
        %1199 = vmatpush1.msra.mxu0 0.0
        %1200 = vmatprep.subr.mxu0 0.0
        %1201 = vmatpush1.msra.mxu0 0.0
        %1202 = vmatprep.subr.mxu0 0.0
        %1203 = vmatpush1.msra.mxu0 0.0
        %1204 = vmatprep.subr.mxu0 0.0
        %1205 = vmatpush1.msra.mxu0 0.0
        %1206 = vmatprep.subr.mxu0 0.0
        %1207 = vmatpush1.msra.mxu0 0.0
        %1208 = vmatprep.subr.mxu0 0.0
        %1209 = vmatpush1.msra.mxu0 0.0
        %1210 = vmatprep.subr.mxu0 0.0
        %1211 = vmatpush1.msra.mxu0 0.0
        %1212 = vmatprep.subr.mxu0 0.0
        %1213 = vmatpush1.msra.mxu0 0.0
        %1214 = vmatprep.subr.mxu0 0.0
        %1215 = vmatpush1.msra.mxu0 0.0
        %1216 = vmatprep.subr.mxu0 0.0
        %1217 = vmatpush1.msra.mxu0 0.0
        %1218 = vmatprep.subr.mxu0 0.0
        %1219 = vmatpush1.msra.mxu0 0.0
        %1220 = vmatprep.subr.mxu0 0.0
        %1221 = vmatpush1.msra.mxu0 0.0
        %1222 = vmatprep.subr.mxu0 0.0
        %1223 = vmatpush1.msra.mxu0 0.0
        %1224 = vmatprep.subr.mxu0 0.0
        %1225 = vmatpush1.msra.mxu0 0.0
        %1226 = vmatprep.subr.mxu0 0.0
        %1227 = vmatpush1.msra.mxu0 0.0
        %1228 = vmatprep.subr.mxu0 0.0
        %1229 = vmatpush1.msra.mxu0 0.0
        %1230 = vmatprep.subr.mxu0 0.0
        %1231 = vmatpush1.msra.mxu0 0.0
        %1232 = vmatprep.subr.mxu0 0.0
        %1233 = vmatpush1.msra.mxu0 0.0
        %1234 = vmatprep.subr.mxu0 0.0
        %1235 = vmatpush1.msra.mxu0 0.0
        %1236 = vmatprep.subr.mxu0 0.0
        %1237 = vmatpush1.msra.mxu0 0.0
        %1238 = vmatprep.subr.mxu0 0.0
        %1239 = vmatpush1.msra.mxu0 0.0
        %1240 = vmatprep.subr.mxu0 0.0
        %1241 = vmatpush1.msra.mxu0 0.0
        %1242 = vmatprep.subr.mxu0 0.0
        %1243 = vmatpush1.msra.mxu0 0.0
        %1244 = vmatprep.subr.mxu0 0.0
        %1245 = vmatpush1.msra.mxu0 0.0
        %1246 = vmatprep.subr.mxu0 0.0
        %1247 = vmatpush1.msra.mxu0 0.0
        %1248 = vmatprep.subr.mxu0 0.0
        %1249 = vmatpush1.msra.mxu0 0.0
        %1250 = vmatprep.mubr.f32.mxu0 0.0
        %1251 = vmatmul.mubr.f32.gmra.mrb[0].mxu0 %v1184
        %v1252 = vpop.f32.mrb[0].mxu0
        %v1253 = vadd.f32 0.0, %v1252
        %v1254 = vpop.f32.mrb[0].mxu0
        %1255 = vdwg.mxu0
        %v1257 = vsel %vm787, %v979, 0
        %1259 = vmatprep.subr.mxu0 0.0
        %1260 = vmatpush1.msra.mxu0 %v982
        %1261 = vmatprep.subr.mxu0 0.0
        %1262 = vmatpush1.msra.mxu0 0.0
        %1263 = vmatprep.subr.mxu0 0.0
        %1264 = vmatpush1.msra.mxu0 0.0
        %1265 = vmatprep.subr.mxu0 0.0
        %1266 = vmatpush1.msra.mxu0 0.0
        %1267 = vmatprep.subr.mxu0 0.0
        %1268 = vmatpush1.msra.mxu0 0.0
        %1269 = vmatprep.subr.mxu0 0.0
        %1270 = vmatpush1.msra.mxu0 0.0
        %1271 = vmatprep.subr.mxu0 0.0
        %1272 = vmatpush1.msra.mxu0 0.0
        %1273 = vmatprep.subr.mxu0 0.0
        %1274 = vmatpush1.msra.mxu0 0.0
        %1275 = vmatprep.subr.mxu0 0.0
        %1276 = vmatpush1.msra.mxu0 0.0
        %1277 = vmatprep.subr.mxu0 0.0
        %1278 = vmatpush1.msra.mxu0 0.0
        %1279 = vmatprep.subr.mxu0 0.0
        %1280 = vmatpush1.msra.mxu0 0.0
        %1281 = vmatprep.subr.mxu0 0.0
        %1282 = vmatpush1.msra.mxu0 0.0
        %1283 = vmatprep.subr.mxu0 0.0
        %1284 = vmatpush1.msra.mxu0 0.0
        %1285 = vmatprep.subr.mxu0 0.0
        %1286 = vmatpush1.msra.mxu0 0.0
        %1287 = vmatprep.subr.mxu0 0.0
        %1288 = vmatpush1.msra.mxu0 0.0
        %1289 = vmatprep.subr.mxu0 0.0
        %1290 = vmatpush1.msra.mxu0 0.0
        %1291 = vmatprep.subr.mxu0 0.0
        %1292 = vmatpush1.msra.mxu0 0.0
        %1293 = vmatprep.subr.mxu0 0.0
        %1294 = vmatpush1.msra.mxu0 0.0
        %1295 = vmatprep.subr.mxu0 0.0
        %1296 = vmatpush1.msra.mxu0 0.0
        %1297 = vmatprep.subr.mxu0 0.0
        %1298 = vmatpush1.msra.mxu0 0.0
        %1299 = vmatprep.subr.mxu0 0.0
        %1300 = vmatpush1.msra.mxu0 0.0
        %1301 = vmatprep.subr.mxu0 0.0
        %1302 = vmatpush1.msra.mxu0 0.0
        %1303 = vmatprep.subr.mxu0 0.0
        %1304 = vmatpush1.msra.mxu0 0.0
        %1305 = vmatprep.subr.mxu0 0.0
        %1306 = vmatpush1.msra.mxu0 0.0
        %1307 = vmatprep.subr.mxu0 0.0
        %1308 = vmatpush1.msra.mxu0 0.0
        %1309 = vmatprep.subr.mxu0 0.0
        %1310 = vmatpush1.msra.mxu0 0.0
        %1311 = vmatprep.subr.mxu0 0.0
        %1312 = vmatpush1.msra.mxu0 0.0
        %1313 = vmatprep.subr.mxu0 0.0
        %1314 = vmatpush1.msra.mxu0 0.0
        %1315 = vmatprep.subr.mxu0 0.0
        %1316 = vmatpush1.msra.mxu0 0.0
        %1317 = vmatprep.subr.mxu0 0.0
        %1318 = vmatpush1.msra.mxu0 0.0
        %1319 = vmatprep.subr.mxu0 0.0
        %1320 = vmatpush1.msra.mxu0 0.0
        %1321 = vmatprep.subr.mxu0 0.0
        %1322 = vmatpush1.msra.mxu0 0.0
        %1323 = vmatprep.mubr.f32.mxu0 0.0
        %1324 = vmatmul.mubr.f32.gmra.mrb[0].mxu0 %v1257
        %v1325 = vpop.f32.mrb[0].mxu0
        %v1326 = vadd.f32 %v1253, %v1325
        %v1327 = vpop.f32.mrb[0].mxu0
        %1328 = vdwg.mxu0
        %1329 = vrot.lane.b32.xlu0 %v614, 112
        %v1330 = vpop.permute.xlu0 %1329
        %1331 = vrot.lane.b32.xlu0 %v698, 112
        %v1332 = vpop.permute.xlu0 %1331
        %v1333 = vsel %vm787, %v1330, 0
        %v1335 = vsel %vm787, %v1332, 0
        %1337 = vmatprep.subr.mxu0 0.0
        %1338 = vmatpush1.xpose.msra.mxu0 %v1335
        %1339 = vmatprep.subr.mxu0 0.0
        %1340 = vmatpush1.xpose.msra.mxu0 0.0
        %1341 = vmatprep.subr.mxu0 0.0
        %1342 = vmatpush1.xpose.msra.mxu0 0.0
        %1343 = vmatprep.subr.mxu0 0.0
        %1344 = vmatpush1.xpose.msra.mxu0 0.0
        %1345 = vmatprep.subr.mxu0 0.0
        %1346 = vmatpush1.xpose.msra.mxu0 0.0
        %1347 = vmatprep.subr.mxu0 0.0
        %1348 = vmatpush1.xpose.msra.mxu0 0.0
        %1349 = vmatprep.subr.mxu0 0.0
        %1350 = vmatpush1.xpose.msra.mxu0 0.0
        %1351 = vmatprep.subr.mxu0 0.0
        %1352 = vmatpush1.xpose.msra.mxu0 0.0
        %1353 = vmatprep.subr.mxu0 0.0
        %1354 = vmatpush1.xpose.msra.mxu0 0.0
        %1355 = vmatprep.subr.mxu0 0.0
        %1356 = vmatpush1.xpose.msra.mxu0 0.0
        %1357 = vmatprep.subr.mxu0 0.0
        %1358 = vmatpush1.xpose.msra.mxu0 0.0
        %1359 = vmatprep.subr.mxu0 0.0
        %1360 = vmatpush1.xpose.msra.mxu0 0.0
        %1361 = vmatprep.subr.mxu0 0.0
        %1362 = vmatpush1.xpose.msra.mxu0 0.0
        %1363 = vmatprep.subr.mxu0 0.0
        %1364 = vmatpush1.xpose.msra.mxu0 0.0
        %1365 = vmatprep.subr.mxu0 0.0
        %1366 = vmatpush1.xpose.msra.mxu0 0.0
        %1367 = vmatprep.subr.mxu0 0.0
        %1368 = vmatpush1.xpose.msra.mxu0 0.0
        %1369 = vmatprep.subr.mxu0 0.0
        %1370 = vmatpush1.xpose.msra.mxu0 0.0
        %1371 = vmatprep.subr.mxu0 0.0
        %1372 = vmatpush1.xpose.msra.mxu0 0.0
        %1373 = vmatprep.subr.mxu0 0.0
        %1374 = vmatpush1.xpose.msra.mxu0 0.0
        %1375 = vmatprep.subr.mxu0 0.0
        %1376 = vmatpush1.xpose.msra.mxu0 0.0
        %1377 = vmatprep.subr.mxu0 0.0
        %1378 = vmatpush1.xpose.msra.mxu0 0.0
        %1379 = vmatprep.subr.mxu0 0.0
        %1380 = vmatpush1.xpose.msra.mxu0 0.0
        %1381 = vmatprep.subr.mxu0 0.0
        %1382 = vmatpush1.xpose.msra.mxu0 0.0
        %1383 = vmatprep.subr.mxu0 0.0
        %1384 = vmatpush1.xpose.msra.mxu0 0.0
        %1385 = vmatprep.subr.mxu0 0.0
        %1386 = vmatpush1.xpose.msra.mxu0 0.0
        %1387 = vmatprep.subr.mxu0 0.0
        %1388 = vmatpush1.xpose.msra.mxu0 0.0
        %1389 = vmatprep.subr.mxu0 0.0
        %1390 = vmatpush1.xpose.msra.mxu0 0.0
        %1391 = vmatprep.subr.mxu0 0.0
        %1392 = vmatpush1.xpose.msra.mxu0 0.0
        %1393 = vmatprep.subr.mxu0 0.0
        %1394 = vmatpush1.xpose.msra.mxu0 0.0
        %1395 = vmatprep.subr.mxu0 0.0
        %1396 = vmatpush1.xpose.msra.mxu0 0.0
        %1397 = vmatprep.subr.mxu0 0.0
        %1398 = vmatpush1.xpose.msra.mxu0 0.0
        %1399 = vmatprep.subr.mxu0 0.0
        %1400 = vmatpush1.xpose.msra.mxu0 0.0
        %1401 = vmatprep.mubr.f32.mxu0 0.0
        %1402 = vmatmul.mubr.f32.gmra.mrb[0].mxu0 %v1333
        %v1403 = vpop.f32.mrb[0].mxu0
        %v1404 = vadd.f32 0.0, %v1403
        %v1405 = vpop.f32.mrb[0].mxu0
        %1406 = vdwg.mxu0
        %v1407 = vmul.f32 %v1404, 0.35355338
        %v1408 = vsel %vm787, %v1407, -inf
        %1409 = vmax.xlane.f32.xlu0 %v1408
        %v1410 = vpop.xlane.xlu0 %1409
        %v1411 = vsub.f32 %v1407, %v1410
        %v1412 = vmul.f32 %v1411, 1.442695
        %v1413 = vpow.pop %v1412
        %v1414 = vsel %vm787, %v1413, 0.0
        %1415 = vadd.xlane.f32.xlu0 %v1414
        %v1416 = vpop.xlane.xlu0 %1415
        %v1417 = vrcp.pop %v1416
        %v1418 = vmul.f32 1.0, %v1417
        %v1419 = vmul.f32 %v1413, %v1418
        %v1420 = vsel %vm787, %v1419, 0.0
        %v1421 = vrot.slane %v1420, 4
        %v1422 = vadd.f32 %v1420, %v1421
        %v1423 = vrot.slane %v1422, 2
        %v1424 = vadd.f32 %v1422, %v1423
        %v1425 = vrot.slane %v1424, 1
        %v1426 = vadd.f32 %v1424, %v1425
        %v1427 = vsel %vm884, %v1426, inf
        %v1428 = vsel %vm787, %v1427, inf
        %1429 = vmin.xlane.f32.xlu0 %v1428
        %v1430 = vpop.xlane.xlu0 %1429
        %vm1431 = vcmp.eq.f32.partialorder %v1427, %v1430
        %v1432 = vsel %vm1431, %v786, 4294967295
        %v1433 = vsel %vm787, %v1432, 2147483648
        %v1434 = vand.u32 %v1433, 65535
        %v1435 = vshra.s32 %v1433, 16
        %v1436 = vcvt.s32.f32 %v1434
        %v1437 = vcvt.s32.f32 %v1435
        %1438 = vmax.xlane.f32.xlu0 %v1437
        %v1439 = vpop.xlane.xlu0 %1438
        %vm1440 = vcmp.eq.f32.partialorder %v1437, %v1439
        %v1441 = vsel %vm1440, %v1436, -inf
        %1442 = vmax.xlane.f32.xlu0 %v1441
        %v1443 = vpop.xlane.xlu0 %1442
        %v1444 = vcvt.f32.s32 %v1443
        %v1445 = vcvt.f32.s32 %v1439
        %v1446 = vshll.u32 %v1445, 16
        %v1447 = vadd.s32 %v1446, %v1444
        %vm1448 = vcmp.eq.s32.totalorder %v786, %v1447
        %v1449 = vsel %vm1448, 0.0, 1.0
        %v1450 = vmul.f32 %v1419, %v1449
        %1451 = vrot.lane.b32.xlu0 %v782, 112
        %v1452 = vpop.permute.xlu0 %1451
        %v1455 = vsel %vm787, %v1450, 0
        %1457 = vmatprep.subr.mxu0 0.0
        %1458 = vmatpush1.msra.mxu0 %v1452
        %1459 = vmatprep.subr.mxu0 0.0
        %1460 = vmatpush1.msra.mxu0 0.0
        %1461 = vmatprep.subr.mxu0 0.0
        %1462 = vmatpush1.msra.mxu0 0.0
        %1463 = vmatprep.subr.mxu0 0.0
        %1464 = vmatpush1.msra.mxu0 0.0
        %1465 = vmatprep.subr.mxu0 0.0
        %1466 = vmatpush1.msra.mxu0 0.0
        %1467 = vmatprep.subr.mxu0 0.0
        %1468 = vmatpush1.msra.mxu0 0.0
        %1469 = vmatprep.subr.mxu0 0.0
        %1470 = vmatpush1.msra.mxu0 0.0
        %1471 = vmatprep.subr.mxu0 0.0
        %1472 = vmatpush1.msra.mxu0 0.0
        %1473 = vmatprep.subr.mxu0 0.0
        %1474 = vmatpush1.msra.mxu0 0.0
        %1475 = vmatprep.subr.mxu0 0.0
        %1476 = vmatpush1.msra.mxu0 0.0
        %1477 = vmatprep.subr.mxu0 0.0
        %1478 = vmatpush1.msra.mxu0 0.0
        %1479 = vmatprep.subr.mxu0 0.0
        %1480 = vmatpush1.msra.mxu0 0.0
        %1481 = vmatprep.subr.mxu0 0.0
        %1482 = vmatpush1.msra.mxu0 0.0
        %1483 = vmatprep.subr.mxu0 0.0
        %1484 = vmatpush1.msra.mxu0 0.0
        %1485 = vmatprep.subr.mxu0 0.0
        %1486 = vmatpush1.msra.mxu0 0.0
        %1487 = vmatprep.subr.mxu0 0.0
        %1488 = vmatpush1.msra.mxu0 0.0
        %1489 = vmatprep.subr.mxu0 0.0
        %1490 = vmatpush1.msra.mxu0 0.0
        %1491 = vmatprep.subr.mxu0 0.0
        %1492 = vmatpush1.msra.mxu0 0.0
        %1493 = vmatprep.subr.mxu0 0.0
        %1494 = vmatpush1.msra.mxu0 0.0
        %1495 = vmatprep.subr.mxu0 0.0
        %1496 = vmatpush1.msra.mxu0 0.0
        %1497 = vmatprep.subr.mxu0 0.0
        %1498 = vmatpush1.msra.mxu0 0.0
        %1499 = vmatprep.subr.mxu0 0.0
        %1500 = vmatpush1.msra.mxu0 0.0
        %1501 = vmatprep.subr.mxu0 0.0
        %1502 = vmatpush1.msra.mxu0 0.0
        %1503 = vmatprep.subr.mxu0 0.0
        %1504 = vmatpush1.msra.mxu0 0.0
        %1505 = vmatprep.subr.mxu0 0.0
        %1506 = vmatpush1.msra.mxu0 0.0
        %1507 = vmatprep.subr.mxu0 0.0
        %1508 = vmatpush1.msra.mxu0 0.0
        %1509 = vmatprep.subr.mxu0 0.0
        %1510 = vmatpush1.msra.mxu0 0.0
        %1511 = vmatprep.subr.mxu0 0.0
        %1512 = vmatpush1.msra.mxu0 0.0
        %1513 = vmatprep.subr.mxu0 0.0
        %1514 = vmatpush1.msra.mxu0 0.0
        %1515 = vmatprep.subr.mxu0 0.0
        %1516 = vmatpush1.msra.mxu0 0.0
        %1517 = vmatprep.subr.mxu0 0.0
        %1518 = vmatpush1.msra.mxu0 0.0
        %1519 = vmatprep.subr.mxu0 0.0
        %1520 = vmatpush1.msra.mxu0 0.0
        %1521 = vmatprep.mubr.f32.mxu0 0.0
        %1522 = vmatmul.mubr.f32.gmra.mrb[0].mxu0 %v1455
        %v1523 = vpop.f32.mrb[0].mxu0
        %v1524 = vadd.f32 0.0, %v1523
        %v1525 = vpop.f32.mrb[0].mxu0
        %1526 = vdwg.mxu0
        %v1527 = vld [vmem:[%s9 + $0x10] sm:$0xff]
        %v1529 = vsel %vm787, %v1524, 0
        %1531 = vmatprep.subr.mxu0 0.0
        %1532 = vmatpush1.msra.mxu0 %v1527
        %1533 = vmatprep.subr.mxu0 0.0
        %1534 = vmatpush1.msra.mxu0 0.0
        %1535 = vmatprep.subr.mxu0 0.0
        %1536 = vmatpush1.msra.mxu0 0.0
        %1537 = vmatprep.subr.mxu0 0.0
        %1538 = vmatpush1.msra.mxu0 0.0
        %1539 = vmatprep.subr.mxu0 0.0
        %1540 = vmatpush1.msra.mxu0 0.0
        %1541 = vmatprep.subr.mxu0 0.0
        %1542 = vmatpush1.msra.mxu0 0.0
        %1543 = vmatprep.subr.mxu0 0.0
        %1544 = vmatpush1.msra.mxu0 0.0
        %1545 = vmatprep.subr.mxu0 0.0
        %1546 = vmatpush1.msra.mxu0 0.0
        %1547 = vmatprep.subr.mxu0 0.0
        %1548 = vmatpush1.msra.mxu0 0.0
        %1549 = vmatprep.subr.mxu0 0.0
        %1550 = vmatpush1.msra.mxu0 0.0
        %1551 = vmatprep.subr.mxu0 0.0
        %1552 = vmatpush1.msra.mxu0 0.0
        %1553 = vmatprep.subr.mxu0 0.0
        %1554 = vmatpush1.msra.mxu0 0.0
        %1555 = vmatprep.subr.mxu0 0.0
        %1556 = vmatpush1.msra.mxu0 0.0
        %1557 = vmatprep.subr.mxu0 0.0
        %1558 = vmatpush1.msra.mxu0 0.0
        %1559 = vmatprep.subr.mxu0 0.0
        %1560 = vmatpush1.msra.mxu0 0.0
        %1561 = vmatprep.subr.mxu0 0.0
        %1562 = vmatpush1.msra.mxu0 0.0
        %1563 = vmatprep.subr.mxu0 0.0
        %1564 = vmatpush1.msra.mxu0 0.0
        %1565 = vmatprep.subr.mxu0 0.0
        %1566 = vmatpush1.msra.mxu0 0.0
        %1567 = vmatprep.subr.mxu0 0.0
        %1568 = vmatpush1.msra.mxu0 0.0
        %1569 = vmatprep.subr.mxu0 0.0
        %1570 = vmatpush1.msra.mxu0 0.0
        %1571 = vmatprep.subr.mxu0 0.0
        %1572 = vmatpush1.msra.mxu0 0.0
        %1573 = vmatprep.subr.mxu0 0.0
        %1574 = vmatpush1.msra.mxu0 0.0
        %1575 = vmatprep.subr.mxu0 0.0
        %1576 = vmatpush1.msra.mxu0 0.0
        %1577 = vmatprep.subr.mxu0 0.0
        %1578 = vmatpush1.msra.mxu0 0.0
        %1579 = vmatprep.subr.mxu0 0.0
        %1580 = vmatpush1.msra.mxu0 0.0
        %1581 = vmatprep.subr.mxu0 0.0
        %1582 = vmatpush1.msra.mxu0 0.0
        %1583 = vmatprep.subr.mxu0 0.0
        %1584 = vmatpush1.msra.mxu0 0.0
        %1585 = vmatprep.subr.mxu0 0.0
        %1586 = vmatpush1.msra.mxu0 0.0
        %1587 = vmatprep.subr.mxu0 0.0
        %1588 = vmatpush1.msra.mxu0 0.0
        %1589 = vmatprep.subr.mxu0 0.0
        %1590 = vmatpush1.msra.mxu0 0.0
        %1591 = vmatprep.subr.mxu0 0.0
        %1592 = vmatpush1.msra.mxu0 0.0
        %1593 = vmatprep.subr.mxu0 0.0
        %1594 = vmatpush1.msra.mxu0 0.0
        %1595 = vmatprep.mubr.f32.mxu0 0.0
        %1596 = vmatmul.mubr.f32.gmra.mrb[0].mxu0 %v1529
        %v1597 = vpop.f32.mrb[0].mxu0
        %v1598 = vadd.f32 0.0, %v1597
        %v1599 = vpop.f32.mrb[0].mxu0
        %1600 = vdwg.mxu0
        %v1601 = vadd.f32 %v1326, %v1598
        %1602 = vrot.lane.b32.xlu0 %v614, 104
        %v1603 = vpop.permute.xlu0 %1602
        %1604 = vrot.lane.b32.xlu0 %v698, 104
        %v1605 = vpop.permute.xlu0 %1604
        %v1606 = vsel %vm787, %v1603, 0
        %v1608 = vsel %vm787, %v1605, 0
        %1610 = vmatprep.subr.mxu0 0.0
        %1611 = vmatpush1.xpose.msra.mxu0 %v1608
        %1612 = vmatprep.subr.mxu0 0.0
        %1613 = vmatpush1.xpose.msra.mxu0 0.0
        %1614 = vmatprep.subr.mxu0 0.0
        %1615 = vmatpush1.xpose.msra.mxu0 0.0
        %1616 = vmatprep.subr.mxu0 0.0
        %1617 = vmatpush1.xpose.msra.mxu0 0.0
        %1618 = vmatprep.subr.mxu0 0.0
        %1619 = vmatpush1.xpose.msra.mxu0 0.0
        %1620 = vmatprep.subr.mxu0 0.0
        %1621 = vmatpush1.xpose.msra.mxu0 0.0
        %1622 = vmatprep.subr.mxu0 0.0
        %1623 = vmatpush1.xpose.msra.mxu0 0.0
        %1624 = vmatprep.subr.mxu0 0.0
        %1625 = vmatpush1.xpose.msra.mxu0 0.0
        %1626 = vmatprep.subr.mxu0 0.0
        %1627 = vmatpush1.xpose.msra.mxu0 0.0
        %1628 = vmatprep.subr.mxu0 0.0
        %1629 = vmatpush1.xpose.msra.mxu0 0.0
        %1630 = vmatprep.subr.mxu0 0.0
        %1631 = vmatpush1.xpose.msra.mxu0 0.0
        %1632 = vmatprep.subr.mxu0 0.0
        %1633 = vmatpush1.xpose.msra.mxu0 0.0
        %1634 = vmatprep.subr.mxu0 0.0
        %1635 = vmatpush1.xpose.msra.mxu0 0.0
        %1636 = vmatprep.subr.mxu0 0.0
        %1637 = vmatpush1.xpose.msra.mxu0 0.0
        %1638 = vmatprep.subr.mxu0 0.0
        %1639 = vmatpush1.xpose.msra.mxu0 0.0
        %1640 = vmatprep.subr.mxu0 0.0
        %1641 = vmatpush1.xpose.msra.mxu0 0.0
        %1642 = vmatprep.subr.mxu0 0.0
        %1643 = vmatpush1.xpose.msra.mxu0 0.0
        %1644 = vmatprep.subr.mxu0 0.0
        %1645 = vmatpush1.xpose.msra.mxu0 0.0
        %1646 = vmatprep.subr.mxu0 0.0
        %1647 = vmatpush1.xpose.msra.mxu0 0.0
        %1648 = vmatprep.subr.mxu0 0.0
        %1649 = vmatpush1.xpose.msra.mxu0 0.0
        %1650 = vmatprep.subr.mxu0 0.0
        %1651 = vmatpush1.xpose.msra.mxu0 0.0
        %1652 = vmatprep.subr.mxu0 0.0
        %1653 = vmatpush1.xpose.msra.mxu0 0.0
        %1654 = vmatprep.subr.mxu0 0.0
        %1655 = vmatpush1.xpose.msra.mxu0 0.0
        %1656 = vmatprep.subr.mxu0 0.0
        %1657 = vmatpush1.xpose.msra.mxu0 0.0
        %1658 = vmatprep.subr.mxu0 0.0
        %1659 = vmatpush1.xpose.msra.mxu0 0.0
        %1660 = vmatprep.subr.mxu0 0.0
        %1661 = vmatpush1.xpose.msra.mxu0 0.0
        %1662 = vmatprep.subr.mxu0 0.0
        %1663 = vmatpush1.xpose.msra.mxu0 0.0
        %1664 = vmatprep.subr.mxu0 0.0
        %1665 = vmatpush1.xpose.msra.mxu0 0.0
        %1666 = vmatprep.subr.mxu0 0.0
        %1667 = vmatpush1.xpose.msra.mxu0 0.0
        %1668 = vmatprep.subr.mxu0 0.0
        %1669 = vmatpush1.xpose.msra.mxu0 0.0
        %1670 = vmatprep.subr.mxu0 0.0
        %1671 = vmatpush1.xpose.msra.mxu0 0.0
        %1672 = vmatprep.subr.mxu0 0.0
        %1673 = vmatpush1.xpose.msra.mxu0 0.0
        %1674 = vmatprep.mubr.f32.mxu0 0.0
        %1675 = vmatmul.mubr.f32.gmra.mrb[0].mxu0 %v1606
        %v1676 = vpop.f32.mrb[0].mxu0
        %v1677 = vadd.f32 0.0, %v1676
        %v1678 = vpop.f32.mrb[0].mxu0
        %1679 = vdwg.mxu0
        %v1680 = vmul.f32 %v1677, 0.35355338
        %v1681 = vsel %vm787, %v1680, -inf
        %1682 = vmax.xlane.f32.xlu0 %v1681
        %v1683 = vpop.xlane.xlu0 %1682
        %v1684 = vsub.f32 %v1680, %v1683
        %v1685 = vmul.f32 %v1684, 1.442695
        %v1686 = vpow.pop %v1685
        %v1687 = vsel %vm787, %v1686, 0.0
        %1688 = vadd.xlane.f32.xlu0 %v1687
        %v1689 = vpop.xlane.xlu0 %1688
        %v1690 = vrcp.pop %v1689
        %v1691 = vmul.f32 1.0, %v1690
        %v1692 = vmul.f32 %v1686, %v1691
        %v1693 = vsel %vm787, %v1692, 0.0
        %v1694 = vrot.slane %v1693, 4
        %v1695 = vadd.f32 %v1693, %v1694
        %v1696 = vrot.slane %v1695, 2
        %v1697 = vadd.f32 %v1695, %v1696
        %v1698 = vrot.slane %v1697, 1
        %v1699 = vadd.f32 %v1697, %v1698
        %v1700 = vsel %vm884, %v1699, inf
        %v1701 = vsel %vm787, %v1700, inf
        %1702 = vmin.xlane.f32.xlu0 %v1701
        %v1703 = vpop.xlane.xlu0 %1702
        %vm1704 = vcmp.eq.f32.partialorder %v1700, %v1703
        %v1705 = vsel %vm1704, %v786, 4294967295
        %v1706 = vsel %vm787, %v1705, 2147483648
        %v1707 = vand.u32 %v1706, 65535
        %v1708 = vshra.s32 %v1706, 16
        %v1709 = vcvt.s32.f32 %v1707
        %v1710 = vcvt.s32.f32 %v1708
        %1711 = vmax.xlane.f32.xlu0 %v1710
        %v1712 = vpop.xlane.xlu0 %1711
        %vm1713 = vcmp.eq.f32.partialorder %v1710, %v1712
        %v1714 = vsel %vm1713, %v1709, -inf
        %1715 = vmax.xlane.f32.xlu0 %v1714
        %v1716 = vpop.xlane.xlu0 %1715
        %v1717 = vcvt.f32.s32 %v1716
        %v1718 = vcvt.f32.s32 %v1712
        %v1719 = vshll.u32 %v1718, 16
        %v1720 = vadd.s32 %v1719, %v1717
        %vm1721 = vcmp.eq.s32.totalorder %v786, %v1720
        %v1722 = vsel %vm1721, 0.0, 1.0
        %v1723 = vmul.f32 %v1692, %v1722
        %1724 = vrot.lane.b32.xlu0 %v782, 104
        %v1725 = vpop.permute.xlu0 %1724
        %v1728 = vsel %vm787, %v1723, 0
        %1730 = vmatprep.subr.mxu0 0.0
        %1731 = vmatpush1.msra.mxu0 %v1725
        %1732 = vmatprep.subr.mxu0 0.0
        %1733 = vmatpush1.msra.mxu0 0.0
        %1734 = vmatprep.subr.mxu0 0.0
        %1735 = vmatpush1.msra.mxu0 0.0
        %1736 = vmatprep.subr.mxu0 0.0
        %1737 = vmatpush1.msra.mxu0 0.0
        %1738 = vmatprep.subr.mxu0 0.0
        %1739 = vmatpush1.msra.mxu0 0.0
        %1740 = vmatprep.subr.mxu0 0.0
        %1741 = vmatpush1.msra.mxu0 0.0
        %1742 = vmatprep.subr.mxu0 0.0
        %1743 = vmatpush1.msra.mxu0 0.0
        %1744 = vmatprep.subr.mxu0 0.0
        %1745 = vmatpush1.msra.mxu0 0.0
        %1746 = vmatprep.subr.mxu0 0.0
        %1747 = vmatpush1.msra.mxu0 0.0
        %1748 = vmatprep.subr.mxu0 0.0
        %1749 = vmatpush1.msra.mxu0 0.0
        %1750 = vmatprep.subr.mxu0 0.0
        %1751 = vmatpush1.msra.mxu0 0.0
        %1752 = vmatprep.subr.mxu0 0.0
        %1753 = vmatpush1.msra.mxu0 0.0
        %1754 = vmatprep.subr.mxu0 0.0
        %1755 = vmatpush1.msra.mxu0 0.0
        %1756 = vmatprep.subr.mxu0 0.0
        %1757 = vmatpush1.msra.mxu0 0.0
        %1758 = vmatprep.subr.mxu0 0.0
        %1759 = vmatpush1.msra.mxu0 0.0
        %1760 = vmatprep.subr.mxu0 0.0
        %1761 = vmatpush1.msra.mxu0 0.0
        %1762 = vmatprep.subr.mxu0 0.0
        %1763 = vmatpush1.msra.mxu0 0.0
        %1764 = vmatprep.subr.mxu0 0.0
        %1765 = vmatpush1.msra.mxu0 0.0
        %1766 = vmatprep.subr.mxu0 0.0
        %1767 = vmatpush1.msra.mxu0 0.0
        %1768 = vmatprep.subr.mxu0 0.0
        %1769 = vmatpush1.msra.mxu0 0.0
        %1770 = vmatprep.subr.mxu0 0.0
        %1771 = vmatpush1.msra.mxu0 0.0
        %1772 = vmatprep.subr.mxu0 0.0
        %1773 = vmatpush1.msra.mxu0 0.0
        %1774 = vmatprep.subr.mxu0 0.0
        %1775 = vmatpush1.msra.mxu0 0.0
        %1776 = vmatprep.subr.mxu0 0.0
        %1777 = vmatpush1.msra.mxu0 0.0
        %1778 = vmatprep.subr.mxu0 0.0
        %1779 = vmatpush1.msra.mxu0 0.0
        %1780 = vmatprep.subr.mxu0 0.0
        %1781 = vmatpush1.msra.mxu0 0.0
        %1782 = vmatprep.subr.mxu0 0.0
        %1783 = vmatpush1.msra.mxu0 0.0
        %1784 = vmatprep.subr.mxu0 0.0
        %1785 = vmatpush1.msra.mxu0 0.0
        %1786 = vmatprep.subr.mxu0 0.0
        %1787 = vmatpush1.msra.mxu0 0.0
        %1788 = vmatprep.subr.mxu0 0.0
        %1789 = vmatpush1.msra.mxu0 0.0
        %1790 = vmatprep.subr.mxu0 0.0
        %1791 = vmatpush1.msra.mxu0 0.0
        %1792 = vmatprep.subr.mxu0 0.0
        %1793 = vmatpush1.msra.mxu0 0.0
        %1794 = vmatprep.mubr.f32.mxu0 0.0
        %1795 = vmatmul.mubr.f32.gmra.mrb[0].mxu0 %v1728
        %v1796 = vpop.f32.mrb[0].mxu0
        %v1797 = vadd.f32 0.0, %v1796
        %v1798 = vpop.f32.mrb[0].mxu0
        %1799 = vdwg.mxu0
        %v1800 = vld [vmem:[%s9 + $0x18] sm:$0xff]
        %v1802 = vsel %vm787, %v1797, 0
        %1804 = vmatprep.subr.mxu0 0.0
        %1805 = vmatpush1.msra.mxu0 %v1800
        %1806 = vmatprep.subr.mxu0 0.0
        %1807 = vmatpush1.msra.mxu0 0.0
        %1808 = vmatprep.subr.mxu0 0.0
        %1809 = vmatpush1.msra.mxu0 0.0
        %1810 = vmatprep.subr.mxu0 0.0
        %1811 = vmatpush1.msra.mxu0 0.0
        %1812 = vmatprep.subr.mxu0 0.0
        %1813 = vmatpush1.msra.mxu0 0.0
        %1814 = vmatprep.subr.mxu0 0.0
        %1815 = vmatpush1.msra.mxu0 0.0
        %1816 = vmatprep.subr.mxu0 0.0
        %1817 = vmatpush1.msra.mxu0 0.0
        %1818 = vmatprep.subr.mxu0 0.0
        %1819 = vmatpush1.msra.mxu0 0.0
        %1820 = vmatprep.subr.mxu0 0.0
        %1821 = vmatpush1.msra.mxu0 0.0
        %1822 = vmatprep.subr.mxu0 0.0
        %1823 = vmatpush1.msra.mxu0 0.0
        %1824 = vmatprep.subr.mxu0 0.0
        %1825 = vmatpush1.msra.mxu0 0.0
        %1826 = vmatprep.subr.mxu0 0.0
        %1827 = vmatpush1.msra.mxu0 0.0
        %1828 = vmatprep.subr.mxu0 0.0
        %1829 = vmatpush1.msra.mxu0 0.0
        %1830 = vmatprep.subr.mxu0 0.0
        %1831 = vmatpush1.msra.mxu0 0.0
        %1832 = vmatprep.subr.mxu0 0.0
        %1833 = vmatpush1.msra.mxu0 0.0
        %1834 = vmatprep.subr.mxu0 0.0
        %1835 = vmatpush1.msra.mxu0 0.0
        %1836 = vmatprep.subr.mxu0 0.0
        %1837 = vmatpush1.msra.mxu0 0.0
        %1838 = vmatprep.subr.mxu0 0.0
        %1839 = vmatpush1.msra.mxu0 0.0
        %1840 = vmatprep.subr.mxu0 0.0
        %1841 = vmatpush1.msra.mxu0 0.0
        %1842 = vmatprep.subr.mxu0 0.0
        %1843 = vmatpush1.msra.mxu0 0.0
        %1844 = vmatprep.subr.mxu0 0.0
        %1845 = vmatpush1.msra.mxu0 0.0
        %1846 = vmatprep.subr.mxu0 0.0
        %1847 = vmatpush1.msra.mxu0 0.0
        %1848 = vmatprep.subr.mxu0 0.0
        %1849 = vmatpush1.msra.mxu0 0.0
        %1850 = vmatprep.subr.mxu0 0.0
        %1851 = vmatpush1.msra.mxu0 0.0
        %1852 = vmatprep.subr.mxu0 0.0
        %1853 = vmatpush1.msra.mxu0 0.0
        %1854 = vmatprep.subr.mxu0 0.0
        %1855 = vmatpush1.msra.mxu0 0.0
        %1856 = vmatprep.subr.mxu0 0.0
        %1857 = vmatpush1.msra.mxu0 0.0
        %1858 = vmatprep.subr.mxu0 0.0
        %1859 = vmatpush1.msra.mxu0 0.0
        %1860 = vmatprep.subr.mxu0 0.0
        %1861 = vmatpush1.msra.mxu0 0.0
        %1862 = vmatprep.subr.mxu0 0.0
        %1863 = vmatpush1.msra.mxu0 0.0
        %1864 = vmatprep.subr.mxu0 0.0
        %1865 = vmatpush1.msra.mxu0 0.0
        %1866 = vmatprep.subr.mxu0 0.0
        %1867 = vmatpush1.msra.mxu0 0.0
        %1868 = vmatprep.mubr.f32.mxu0 0.0
        %1869 = vmatmul.mubr.f32.gmra.mrb[0].mxu0 %v1802
        %v1870 = vpop.f32.mrb[0].mxu0
        %v1871 = vadd.f32 0.0, %v1870
        %v1872 = vpop.f32.mrb[0].mxu0
        %1873 = vdwg.mxu0
        %v1874 = vadd.f32 %v1601, %v1871
        %v1875 = vld [vmem:[%s10] sm:$0x1]
        %v1877 = vlaneseq
        %v1878 = vshrl.u32 %v1877, 7
        %v1879 = vsub.s32 0, %v1878
        %v1880 = vrot.slane %v1875, %v1879
        %v1882 = vadd.f32 %v1874, %v1880
        %1883 = vst.msk [vmem:[%s528] sm:$0xff] %vm543, %v1882
        %s1884 = sand.u32 %s287, 1
        %s1885 = scalar_lea.sflag [#allocation4], %s1884
        %s1886 = sand.u32 %s287, 1
        %s1887 = smul.addr %s1886, 8
        %s1888 = scalar_lea.vmem [#allocation14], %s1887
        // Predicated region
        $region93: #{tpu_custom_call.1} parent=63 // pred_check
          %p1889 = pneg %p297
        $region94: #{tpu_custom_call.1} parent=63 // pred_check_branch
          %1891 = sbr.rel (%p1889) target = $region96
        $region95: #{tpu_custom_call.1} parent=63 // pred_region
          %s1893 = ssub.s32 128, 128
          %1894 = vsyncadd %s1885, %s1893
          %s1895 = smul.addr %s33, 128
          %s1896 = scalar_lea.hbm %s11, %s1895
          %s1898 = sshll.u32 %s1888, 4
          %s1899 = int_to_ptr.vmem [resolvable:$true] %s1898
          %1901 = dma.vmem_to_hbm [thread:$0]  %s1899, 128, %s1896, %s1885
        $region96: #{tpu_custom_call.1} parent=63 // pred_fallthru
          _
      $region64: #{tpu_custom_call.1} parent=5 // pred_fallthru
        _
      %p1902 = scmp.le.s32.totalorder 2, %s28
      // Predicated region
      $region97: #{tpu_custom_call.1} parent=5 // pred_check
        %p1903 = pneg %p1902
      $region98: #{tpu_custom_call.1} parent=5 // pred_check_branch
        %1905 = sbr.rel (%p1903) target = $region100
      $region99: #{tpu_custom_call.1} parent=5 // pred_region
        %s1906 = ssub.s32 %s28, 2
        // Predicated region
        $region101: #{tpu_custom_call.1} parent=99 // pred_check
          %p1907 = pneg %p303
        $region102: #{tpu_custom_call.1} parent=99 // pred_check_branch
          %1909 = sbr.rel (%p1907) target = $region104
        $region103: #{tpu_custom_call.1} parent=99 // pred_region
          %s1910 = sand.u32 %s288, 1
          %s1911 = scalar_lea.sflag [#allocation4], %s1910
          %s1912 = sand.u32 %s288, 1
          %s1913 = smul.addr %s1912, 8
          %s1914 = scalar_lea.vmem [#allocation14], %s1913
          %1915 = dma.done %s1911, 128
        $region104: #{tpu_custom_call.1} parent=99 // pred_fallthru
          _
      $region100: #{tpu_custom_call.1} parent=5 // pred_fallthru
        _
    $region6: #{tpu_custom_call.1} parent=1 // loop_footer
      %s32 = sadd.s32 1, %s28
    $region7: #{tpu_custom_call.1} parent=1 // loop_footer_branch
      %27 = sbr.rel target = $region3
    $region8: #{tpu_custom_call.1} parent=1 // loop_exit
      _
    %1916 = vsyncpa [#allocation3], 1
    %s1917 = scalar_lea.sflag [#allocation3], 1
    %1918 = vsyncpa %s1917, 1
    %1919 = vsyncpa [#allocation6], 1
    %s1920 = scalar_lea.sflag [#allocation6], 1
    %1921 = vsyncpa %s1920, 1
    %1922 = vsyncpa [#allocation9], 1
    %1923 = vsyncpa [#allocation12], 1
    %1924 = vsyncpa [#allocation4], 1
    %s1925 = scalar_lea.sflag [#allocation4], 1
    %1926 = vsyncpa %s1925, 1

</llo_original>
